<compile_context>
chip_gen: v6e
topology: v6e:2x2x1
jax: 0.10.0
libtpu: 0.0.40
codegen_flags: <defaults>
</compile_context>

<pallas_src>
import jax
import jax.numpy as jnp
from jax.experimental import pallas as pl
from jax.experimental.pallas import tpu as pltpu


def _leaky_relu(x, slope=0.2):
    return jnp.where(x > 0, x, slope * x)


def discriminator_kernel(x_ref, w1_ref, b1_ref, w2_ref, b2_ref, w3_ref, b3_ref,
                         o_ref):
    # Input tile (TB, 1024); cast to bf16 for the MXU.  This is free VPU
    # filler under the matmul and a no-op when activations arrive as bf16.
    x = x_ref[...].astype(jnp.bfloat16)

    h1 = jnp.dot(x, w1_ref[...], preferred_element_type=jnp.float32)
    h1 = _leaky_relu(h1 + b1_ref[...])                        # (TB, 512) f32

    h2 = jnp.dot(h1.astype(jnp.bfloat16), w2_ref[...],
                 preferred_element_type=jnp.float32)
    h2 = _leaky_relu(h2 + b2_ref[...])                        # (TB, 256) f32

    # Final 256 -> 1 projection on the VPU (avoids a wasteful N=1 MXU matmul).
    # w3_ref is the weight column reshaped to a (1, 256) row.
    z = jnp.sum(h2 * w3_ref[...], axis=-1, keepdims=True) + b3_ref[...]

    # Numerically stable sigmoid: only exp(-|z|) is evaluated, so nothing
    # overflows and we never rely on inf propagating through the approximate
    # reciprocal.  exp and reciprocal both land on the (idle) EUP slot.
    e = jnp.exp(-jnp.abs(z))
    r = pl.reciprocal(1.0 + e, approx=True)
    o_ref[...] = jnp.where(z >= 0, r, e * r).astype(o_ref.dtype)


def _round_up(x, m):
    return ((x + m - 1) // m) * m


def discriminator_forward(img, params, *, tb=512):
    """img: (B, 1, 32, 32) float32 or bfloat16 (NCHW). Returns (B, 1) float32.

    GAN usage note: when scoring real + fake batches in the same training
    step, concatenate them along the batch axis and make a single call so the
    ~1.3 MiB of bf16 weights are streamed into VMEM only once.
    """
    w1, b1, w2, b2, w3, b3 = params
    B = img.shape[0]

    # Pass the activation dtype through: if the producer already emits bf16
    # the input DMA bytes are halved.  Do NOT insert a standalone f32->bf16
    # cast here -- that would cost an extra HBM round trip in the wrapper.
    x = img.reshape(B, -1)
    if x.dtype not in (jnp.float32, jnp.bfloat16):
        x = x.astype(jnp.float32)
    assert x.shape[1] == 1024

    # bf16 weights: half the HBM bytes and native MXU input format.
    w1b = w1.astype(jnp.bfloat16)                             # (1024, 512)
    w2b = w2.astype(jnp.bfloat16)                             # (512, 256)
    w3_row = w3.reshape(1, 256).astype(jnp.float32)           # VPU epilogue, f32
    b1_2d = b1.reshape(1, 512).astype(jnp.float32)
    b2_2d = b2.reshape(1, 256).astype(jnp.float32)
    b3_2d = b3.reshape(1, 1).astype(jnp.float32)

    # --- Batch tiling --------------------------------------------------------
    # TB defaults to 512 (sweep it; v5e/v6e tolerate 1024) to amortize the
    # ~0.35 us per-grid-step overhead.  Cap TB at half the (8-rounded) batch so
    # the grid always has >= 2 steps when possible and the "parallel" batch
    # axis actually splits across both v7x TensorCores.
    B8 = _round_up(B, 8)
    TB = min(tb, B8)
    if B8 >= 16:
        TB = min(TB, _round_up(pl.cdiv(B8, 2), 8))
    TB = max(8, TB)
    Bp = _round_up(B, TB)
    if Bp != B:
        x = jnp.pad(x, ((0, Bp - B), (0, 0)))
    grid = (Bp // TB,)

    cost = pl.CostEstimate(
        flops=2 * Bp * (1024 * 512 + 512 * 256 + 256),
        transcendentals=2 * Bp,
        bytes_accessed=(w1b.size + w2b.size) * 2
        + (b1_2d.size + b2_2d.size + w3_row.size + b3_2d.size) * 4
        + Bp * 1024 * x.dtype.itemsize + Bp * 4,
    )

    # Constant-index weights/biases are only DMA'd once: single-buffer them so
    # the default double-buffering does not waste a second VMEM copy.
    resident = dict(pipeline_mode=pl.Buffered(1))

    grid_spec = pltpu.PrefetchScalarGridSpec(
        num_scalar_prefetch=0,
        grid=grid,
        in_specs=[
            pl.BlockSpec((TB, 1024), lambda i: (i, 0)),       # streamed input
            pl.BlockSpec((1024, 512), lambda i: (0, 0), **resident),
            pl.BlockSpec((1, 512), lambda i: (0, 0), **resident),
            pl.BlockSpec((512, 256), lambda i: (0, 0), **resident),
            pl.BlockSpec((1, 256), lambda i: (0, 0), **resident),
            pl.BlockSpec((1, 256), lambda i: (0, 0), **resident),
            pl.BlockSpec((1, 1), lambda i: (0, 0), **resident),
        ],
        out_specs=pl.BlockSpec((TB, 1), lambda i: (i, 0)),
    )

    out = pl.pallas_call(
        discriminator_kernel,
        out_shape=jax.ShapeDtypeStruct((Bp, 1), jnp.float32),
        grid_spec=grid_spec,
        compiler_params=pltpu.CompilerParams(
            dimension_semantics=("parallel",),
            # TB=1024 f32 path peaks around ~14 MiB of VMEM; 32 MiB leaves
            # comfortable headroom and stays well under v7x's 64 MiB physical.
            vmem_limit_bytes=32 * 1024 * 1024),
        cost_estimate=cost,
    )(x, w1b, b1_2d, w2b, b2_2d, w3_row, b3_2d)

    return out[:B]


def init_params(key):
    """Synthetic parameters matching the nn.Linear layers. Weights are stored
    as (in_features, out_features) so the kernel computes x @ W + b
    (equivalent to PyTorch's x @ W_pt.T + b)."""
    k1, k2, k3 = jax.random.split(key, 3)
    w1 = jax.random.normal(k1, (1024, 512), jnp.float32) * 0.02
    b1 = jnp.zeros((1, 512), jnp.float32)
    w2 = jax.random.normal(k2, (512, 256), jnp.float32) * 0.02
    b2 = jnp.zeros((1, 256), jnp.float32)
    w3 = jax.random.normal(k3, (256, 1), jnp.float32) * 0.02
    b3 = jnp.zeros((1, 1), jnp.float32)
    return (w1, b1, w2, b2, w3, b3)


def reference_forward(img, params):
    """Pure-JAX f32 reference (matches the PyTorch module semantics)."""
    w1, b1, w2, b2, w3, b3 = params
    x = img.reshape(img.shape[0], -1).astype(jnp.float32)
    h1 = x @ w1 + b1
    h1 = jnp.where(h1 > 0, h1, 0.2 * h1)
    h2 = h1 @ w2 + b2
    h2 = jnp.where(h2 > 0, h2, 0.2 * h2)
    return jax.nn.sigmoid(h2 @ w3 + b3)


if __name__ == "__main__":
    key = jax.random.PRNGKey(0)
    k_img, k_par, k_big = jax.random.split(key, 3)

    params = init_params(k_par)

    # Small batch; 1x32x32 image so flattened dim == 1024 (Linear(1024, ...)).
    img = jax.random.normal(k_img, (2, 1, 32, 32), jnp.float32)
    out = jax.block_until_ready(discriminator_forward(img, params))
    ref = reference_forward(img, params)
    assert out.shape == (2, 1)
    # bf16 matmul inputs + approximate reciprocal -> relaxed tolerance.
    assert jnp.allclose(out, ref, atol=2e-2, rtol=2e-2)

    # Tiled / padded / multi-step path (B=300 -> TB=152, grid=(2,), padding).
    img_big = jax.random.normal(k_big, (300, 1, 32, 32), jnp.float32)
    out_big = jax.block_until_ready(discriminator_forward(img_big, params))
    ref_big = reference_forward(img_big, params)
    assert out_big.shape == (300, 1)
    assert jnp.allclose(out_big, ref_big, atol=2e-2, rtol=2e-2)

    # bf16-activation pass-through path (halved input DMA when upstream emits
    # bf16); looser tolerance because the inputs themselves are quantized.
    out_bf16 = jax.block_until_ready(
        discriminator_forward(img_big.astype(jnp.bfloat16), params))
    assert out_bf16.shape == (300, 1)
    assert jnp.allclose(out_bf16, ref_big, atol=5e-2, rtol=5e-2)

    print("KERNEL_OK")
</pallas_src>

<mosaic_0001>
module attributes {stable_mosaic.version = 11 : i64} {
  func.func @discriminator_kernel(%arg0: i32, %arg1: memref<8x1024xf32, #tpu.memory_space<vmem>>, %arg2: memref<1024x512xbf16, #tpu.memory_space<vmem>>, %arg3: memref<1x512xf32, #tpu.memory_space<vmem>>, %arg4: memref<512x256xbf16, #tpu.memory_space<vmem>>, %arg5: memref<1x256xf32, #tpu.memory_space<vmem>>, %arg6: memref<1x256xf32, #tpu.memory_space<vmem>>, %arg7: memref<1x1xf32, #tpu.memory_space<vmem>>, %arg8: memref<8x1xf32, #tpu.memory_space<vmem>>) attributes {dimension_semantics = [#tpu.dimension_semantics<parallel>], iteration_bounds = array<i64: 1>, scalar_prefetch = 0 : i64, scratch_operands = 0 : i64, tpu.core_type = #tpu.core_type<tc>, window_params = [{transform_indices = @transform_0, window_bounds = array<i64: 8, 1024>}, {pipeline_mode = #tpu.pipeline_mode<synchronous>, transform_indices = @transform_1, window_bounds = array<i64: 1024, 512>}, {pipeline_mode = #tpu.pipeline_mode<synchronous>, transform_indices = @transform_2, window_bounds = array<i64: 1, 512>}, {pipeline_mode = #tpu.pipeline_mode<synchronous>, transform_indices = @transform_3, window_bounds = array<i64: 512, 256>}, {pipeline_mode = #tpu.pipeline_mode<synchronous>, transform_indices = @transform_4, window_bounds = array<i64: 1, 256>}, {pipeline_mode = #tpu.pipeline_mode<synchronous>, transform_indices = @transform_5, window_bounds = array<i64: 1, 256>}, {pipeline_mode = #tpu.pipeline_mode<synchronous>, transform_indices = @transform_6, window_bounds = array<i64: 1, 1>}, {transform_indices = @transform_7, window_bounds = array<i64: 8, 1>}]} {
    %c0 = arith.constant 0 : index
    %c0_0 = arith.constant 0 : index
    %0 = vector.load %arg1[%c0, %c0_0] : memref<8x1024xf32, #tpu.memory_space<vmem>>, vector<8x1024xf32>
    %1 = arith.truncf %0 : vector<8x1024xf32> to vector<8x1024xbf16>
    %c0_1 = arith.constant 0 : index
    %c0_2 = arith.constant 0 : index
    %2 = vector.load %arg2[%c0_1, %c0_2] : memref<1024x512xbf16, #tpu.memory_space<vmem>>, vector<1024x512xbf16>
    %cst = arith.constant dense<0.000000e+00> : vector<8x512xf32>
    %3 = tpu.matmul %1, %2, %cst {dimension_numbers = #tpu.dot_dimension_numbers<[1], [0], [0], [1], [0, 0, 1, 1], [], []>} : vector<8x1024xbf16>, vector<1024x512xbf16>, vector<8x512xf32> -> vector<8x512xf32>
    %c0_3 = arith.constant 0 : index
    %c0_4 = arith.constant 0 : index
    %4 = vector.load %arg3[%c0_3, %c0_4] : memref<1x512xf32, #tpu.memory_space<vmem>>, vector<1x512xf32>
    %5 = vector.broadcast %4 : vector<1x512xf32> to vector<8x512xf32>
    %6 = arith.addf %3, %5 : vector<8x512xf32>
    %cst_5 = arith.constant 0.000000e+00 : f32
    %7 = vector.broadcast %cst_5 : f32 to vector<8x512xf32>
    %8 = arith.cmpf ogt, %6, %7 : vector<8x512xf32>
    %cst_6 = arith.constant 2.000000e-01 : f32
    %9 = vector.broadcast %cst_6 : f32 to vector<8x512xf32>
    %10 = arith.mulf %9, %6 : vector<8x512xf32>
    %11 = arith.select %8, %6, %10 : vector<8x512xi1>, vector<8x512xf32>
    %12 = arith.truncf %11 : vector<8x512xf32> to vector<8x512xbf16>
    %c0_7 = arith.constant 0 : index
    %c0_8 = arith.constant 0 : index
    %13 = vector.load %arg4[%c0_7, %c0_8] : memref<512x256xbf16, #tpu.memory_space<vmem>>, vector<512x256xbf16>
    %cst_9 = arith.constant dense<0.000000e+00> : vector<8x256xf32>
    %14 = tpu.matmul %12, %13, %cst_9 {dimension_numbers = #tpu.dot_dimension_numbers<[1], [0], [0], [1], [0, 0, 1, 1], [], []>} : vector<8x512xbf16>, vector<512x256xbf16>, vector<8x256xf32> -> vector<8x256xf32>
    %c0_10 = arith.constant 0 : index
    %c0_11 = arith.constant 0 : index
    %15 = vector.load %arg5[%c0_10, %c0_11] : memref<1x256xf32, #tpu.memory_space<vmem>>, vector<1x256xf32>
    %16 = vector.broadcast %15 : vector<1x256xf32> to vector<8x256xf32>
    %17 = arith.addf %14, %16 : vector<8x256xf32>
    %cst_12 = arith.constant 0.000000e+00 : f32
    %18 = vector.broadcast %cst_12 : f32 to vector<8x256xf32>
    %19 = arith.cmpf ogt, %17, %18 : vector<8x256xf32>
    %cst_13 = arith.constant 2.000000e-01 : f32
    %20 = vector.broadcast %cst_13 : f32 to vector<8x256xf32>
    %21 = arith.mulf %20, %17 : vector<8x256xf32>
    %22 = arith.select %19, %17, %21 : vector<8x256xi1>, vector<8x256xf32>
    %c0_14 = arith.constant 0 : index
    %c0_15 = arith.constant 0 : index
    %23 = vector.load %arg6[%c0_14, %c0_15] : memref<1x256xf32, #tpu.memory_space<vmem>>, vector<1x256xf32>
    %24 = vector.broadcast %23 : vector<1x256xf32> to vector<8x256xf32>
    %25 = arith.mulf %22, %24 : vector<8x256xf32>
    %cst_16 = arith.constant dense<0.000000e+00> : vector<8xf32>
    %26 = vector.multi_reduction <add>, %25, %cst_16 [1] : vector<8x256xf32> to vector<8xf32>
    %27 = vector.shape_cast %26 : vector<8xf32> to vector<8x1xf32>
    %c0_17 = arith.constant 0 : index
    %c0_18 = arith.constant 0 : index
    %28 = vector.load %arg7[%c0_17, %c0_18] : memref<1x1xf32, #tpu.memory_space<vmem>>, vector<1x1xf32>
    %29 = vector.broadcast %28 : vector<1x1xf32> to vector<8x1xf32>
    %30 = arith.addf %27, %29 : vector<8x1xf32>
    %31 = math.absf %30 : vector<8x1xf32>
    %cst_19 = arith.constant 0.000000e+00 : f32
    %32 = vector.broadcast %cst_19 : f32 to vector<8x1xf32>
    %33 = arith.subf %32, %31 : vector<8x1xf32>
    %34 = math.exp %33 : vector<8x1xf32>
    %cst_20 = arith.constant 1.000000e+00 : f32
    %35 = vector.broadcast %cst_20 : f32 to vector<8x1xf32>
    %36 = arith.addf %35, %34 : vector<8x1xf32>
    %37 = tpu.reciprocal %36 {approx = true} : vector<8x1xf32> -> vector<8x1xf32>
    %cst_21 = arith.constant 0.000000e+00 : f32
    %38 = vector.broadcast %cst_21 : f32 to vector<8x1xf32>
    %39 = arith.cmpf oge, %30, %38 : vector<8x1xf32>
    %40 = arith.mulf %34, %37 : vector<8x1xf32>
    %41 = arith.select %39, %37, %40 : vector<8x1xi1>, vector<8x1xf32>
    %c0_22 = arith.constant 0 : index
    %c0_23 = arith.constant 0 : index
    %42 = vector.load %arg8[%c0_22, %c0_23] : memref<8x1xf32, #tpu.memory_space<vmem>>, vector<8x1xf32>
    tpu.vector_store %arg8[%c0_22, %c0_23], %41 {strides = array<i32>} : memref<8x1xf32, #tpu.memory_space<vmem>>, vector<8x1xf32>,
    return
  }
  func.func @transform_0(%arg0: i32) -> (i32, i32) {
    %c0_i32 = arith.constant 0 : i32
    %c0_i32_0 = arith.constant 0 : i32
    return %arg0, %c0_i32 : i32, i32
  }
  func.func @transform_1(%arg0: i32) -> (i32, i32) {
    %c0_i32 = arith.constant 0 : i32
    %c0_i32_0 = arith.constant 0 : i32
    %c0_i32_1 = arith.constant 0 : i32
    return %c0_i32, %c0_i32_0 : i32, i32
  }
  func.func @transform_2(%arg0: i32) -> (i32, i32) {
    %c0_i32 = arith.constant 0 : i32
    %c0_i32_0 = arith.constant 0 : i32
    %c0_i32_1 = arith.constant 0 : i32
    return %c0_i32, %c0_i32_0 : i32, i32
  }
  func.func @transform_3(%arg0: i32) -> (i32, i32) {
    %c0_i32 = arith.constant 0 : i32
    %c0_i32_0 = arith.constant 0 : i32
    %c0_i32_1 = arith.constant 0 : i32
    return %c0_i32, %c0_i32_0 : i32, i32
  }
  func.func @transform_4(%arg0: i32) -> (i32, i32) {
    %c0_i32 = arith.constant 0 : i32
    %c0_i32_0 = arith.constant 0 : i32
    %c0_i32_1 = arith.constant 0 : i32
    return %c0_i32, %c0_i32_0 : i32, i32
  }
  func.func @transform_5(%arg0: i32) -> (i32, i32) {
    %c0_i32 = arith.constant 0 : i32
    %c0_i32_0 = arith.constant 0 : i32
    %c0_i32_1 = arith.constant 0 : i32
    return %c0_i32, %c0_i32_0 : i32, i32
  }
  func.func @transform_6(%arg0: i32) -> (i32, i32) {
    %c0_i32 = arith.constant 0 : i32
    %c0_i32_0 = arith.constant 0 : i32
    %c0_i32_1 = arith.constant 0 : i32
    return %c0_i32, %c0_i32_0 : i32, i32
  }
  func.func @transform_7(%arg0: i32) -> (i32, i32) {
    %c0_i32 = arith.constant 0 : i32
    %c0_i32_0 = arith.constant 0 : i32
    return %arg0, %c0_i32 : i32, i32
  }
}

</mosaic_0001>

<llo_original>
// kernel: tpu_custom_call.1
$region0: #{tpu_custom_call.1}
  #allocation0 [shape = 'u32[]', space=smem, size = 0x4, offset = 0x4, fixed_abs, tag = 'smem constant byte address 0x4 - core index']
  #allocation1 [shape = 'u32[144,128]{1,0:T(1,128)}', space=vmem, size = 0x12000, scoped, tag = 'internal scratch']
  #allocation2 [shape = 'f32[1,1]{1,0:T(1,128)S(1)}', space=vmem, size = 0x200, scoped, tag = 'scoped memory for tpu_custom_call.1']
  %s0 = inlined_call_operand.hbm [shape: f32[8,1024], index: 0, kind: input, shape index: {}]
  %s1 = inlined_call_operand.hbm [shape: bf16[1024,512], index: 1, kind: input, shape index: {}]
  %s2 = inlined_call_operand.vmem [shape: f32[1,512], index: 2, kind: input, shape index: {}]
  %s3 = inlined_call_operand.hbm [shape: bf16[512,256], index: 3, kind: input, shape index: {}]
  %s4 = inlined_call_operand.vmem [shape: f32[1,256], index: 4, kind: input, shape index: {}]
  %s5 = inlined_call_operand.vmem [shape: f32[1,256], index: 5, kind: input, shape index: {}]
  %s6 = inlined_call_operand.<no memory space> [shape: f32[1,1], index: 6, kind: input, shape index: {}]
  %s7 = inlined_call_operand.vmem [shape: f32[8,1], index: 7, kind: output, shape index: {}]
  %s8 = sld [smem:[#allocation0]]
  $region50: #{tpu_custom_call.1} parent=0
    _
  %s10 = ssub.s32 1, %s8
  %s11 = scalar_select 0, %s10, %s8
  %v12 = vstv %s6
  %13 = vst [vmem:[#allocation2] sm:$0x1] %v12
  $region1: #{tpu_custom_call.1} parent=0
    #allocation3 [shape = 'u8[32768]{0}', space=vmem, size = 0x8000, scoped, tag = 'input window, operand 0, single buffered']
    #allocation4 [shape = 's32[1]{0}', space=sflag, size = 0x4, scoped, tag = 'scoped memory for tpu_custom_call.1']
    #allocation5 [shape = 'u8[1048576]{0}', space=vmem, size = 0x100000, scoped, tag = 'input window, operand 1, single buffered']
    #allocation6 [shape = 's32[1]{0}', space=sflag, size = 0x4, scoped, tag = 'scoped memory for tpu_custom_call.1']
    #allocation7 [shape = 'u8[262144]{0}', space=vmem, size = 0x40000, scoped, tag = 'input window, operand 3, single buffered']
    %14 = vsyncpa [#allocation4], 0
    %15 = vsyncpa [#allocation6], 0
    // Predicated region
    $region2: #{tpu_custom_call.1} parent=1 // pred_check
      _
    $region3: #{tpu_custom_call.1} parent=1 // pred_check_branch
      %17 = sbr.rel (0) target = $region5
    $region4: #{tpu_custom_call.1} parent=1 // pred_region
      %s19 = ssub.s32 1024, 1024
      %20 = vsyncadd [#allocation4], %s19
      %s22 = sshll.u32 [#allocation3], 4
      %s23 = int_to_ptr.vmem [resolvable:$true] %s22
      %25 = dma.hbm_to_vmem [thread:$0]  %s0, 1024, %s23, [#allocation4]
    $region5: #{tpu_custom_call.1} parent=1 // pred_fallthru
      _
    // Predicated region
    $region6: #{tpu_custom_call.1} parent=1 // pred_check
      _
    $region7: #{tpu_custom_call.1} parent=1 // pred_check_branch
      %27 = sbr.rel (0) target = $region9
    $region8: #{tpu_custom_call.1} parent=1 // pred_region
      %s29 = ssub.s32 32768, 32768
      %30 = vsyncadd [#allocation6], %s29
      %s31 = sshll.u32 [#allocation5], 4
      %s32 = int_to_ptr.vmem [resolvable:$true] %s31
      %37 = dma.hbm_to_vmem [thread:$0]  %s1, 32768, %s32, [#allocation6], 256, 256, 16
    $region9: #{tpu_custom_call.1} parent=1 // pred_fallthru
      _
    // Predicated region
    $region10: #{tpu_custom_call.1} parent=1 // pred_check
      _
    $region11: #{tpu_custom_call.1} parent=1 // pred_check_branch
      %39 = sbr.rel (0) target = $region13
    $region12: #{tpu_custom_call.1} parent=1 // pred_region
      _
    $region13: #{tpu_custom_call.1} parent=1 // pred_fallthru
      _
    // Predicated region
    $region14: #{tpu_custom_call.1} parent=1 // pred_check
      _
    $region15: #{tpu_custom_call.1} parent=1 // pred_check_branch
      %41 = sbr.rel (0) target = $region17
    $region16: #{tpu_custom_call.1} parent=1 // pred_region
      %s43 = ssub.s32 8192, 8192
      %44 = vsyncadd [#allocation6], %s43
      %s45 = sshll.u32 [#allocation7], 4
      %s46 = int_to_ptr.vmem [resolvable:$true] %s45
      %51 = dma.hbm_to_vmem [thread:$0]  %s3, 8192, %s46, [#allocation6], 128, 128, 8
    $region17: #{tpu_custom_call.1} parent=1 // pred_fallthru
      _
    // Predicated region
    $region18: #{tpu_custom_call.1} parent=1 // pred_check
      _
    $region19: #{tpu_custom_call.1} parent=1 // pred_check_branch
      %53 = sbr.rel (0) target = $region21
    $region20: #{tpu_custom_call.1} parent=1 // pred_region
      _
    $region21: #{tpu_custom_call.1} parent=1 // pred_fallthru
      _
    // Predicated region
    $region22: #{tpu_custom_call.1} parent=1 // pred_check
      _
    $region23: #{tpu_custom_call.1} parent=1 // pred_check_branch
      %55 = sbr.rel (0) target = $region25
    $region24: #{tpu_custom_call.1} parent=1 // pred_region
      _
    $region25: #{tpu_custom_call.1} parent=1 // pred_fallthru
      _
    // Predicated region
    $region26: #{tpu_custom_call.1} parent=1 // pred_check
      _
    $region27: #{tpu_custom_call.1} parent=1 // pred_check_branch
      %57 = sbr.rel (0) target = $region29
    $region28: #{tpu_custom_call.1} parent=1 // pred_region
      _
    $region29: #{tpu_custom_call.1} parent=1 // pred_fallthru
      _
    // Predicated region
    $region30: #{tpu_custom_call.1} parent=1 // pred_check
      _
    $region31: #{tpu_custom_call.1} parent=1 // pred_check_branch
      %59 = sbr.rel (0) target = $region33
    $region32: #{tpu_custom_call.1} parent=1 // pred_region
      %60 = dma.done [#allocation4], 1024
    $region33: #{tpu_custom_call.1} parent=1 // pred_fallthru
      _
    // Predicated region
    $region34: #{tpu_custom_call.1} parent=1 // pred_check
      _
    $region35: #{tpu_custom_call.1} parent=1 // pred_check_branch
      %62 = sbr.rel (0) target = $region37
    $region36: #{tpu_custom_call.1} parent=1 // pred_region
      %63 = dma.done [#allocation6], 32768
    $region37: #{tpu_custom_call.1} parent=1 // pred_fallthru
      _
    // Predicated region
    $region38: #{tpu_custom_call.1} parent=1 // pred_check
      _
    $region39: #{tpu_custom_call.1} parent=1 // pred_check_branch
      %65 = sbr.rel (0) target = $region41
    $region40: #{tpu_custom_call.1} parent=1 // pred_region
      %66 = dma.done [#allocation6], 8192
    $region41: #{tpu_custom_call.1} parent=1 // pred_fallthru
      _
    %v67 = vld [vmem:[#allocation3] sm:$0xff]
    %v68 = vld [vmem:[#allocation3 + $0x8] sm:$0xff]
    %v69 = vld [vmem:[#allocation3 + $0x10] sm:$0xff]
    %v70 = vld [vmem:[#allocation3 + $0x18] sm:$0xff]
    %v71 = vld [vmem:[#allocation3 + $0x20] sm:$0xff]
    %v72 = vld [vmem:[#allocation3 + $0x28] sm:$0xff]
    %v73 = vld [vmem:[#allocation3 + $0x30] sm:$0xff]
    %v74 = vld [vmem:[#allocation3 + $0x38] sm:$0xff]
    %v75 = vpack.c.bf16 %v67, %v67
    %v76 = vpack.c.bf16 %v68, %v68
    %v77 = vpack.c.bf16 %v69, %v69
    %v78 = vpack.c.bf16 %v70, %v70
    %v79 = vpack.c.bf16 %v71, %v71
    %v80 = vpack.c.bf16 %v72, %v72
    %v81 = vpack.c.bf16 %v73, %v73
    %v82 = vpack.c.bf16 %v74, %v74
    %v83 = vld [vmem:[#allocation5] sm:$0xff]
    %v84 = vld [vmem:[#allocation5 + $0x8] sm:$0xff]
    %v85 = vld [vmem:[#allocation5 + $0x10] sm:$0xff]
    %v86 = vld [vmem:[#allocation5 + $0x18] sm:$0xff]
    %v87 = vld [vmem:[#allocation5 + $0x20] sm:$0xff]
    %v88 = vld [vmem:[#allocation5 + $0x28] sm:$0xff]
    %v89 = vld [vmem:[#allocation5 + $0x30] sm:$0xff]
    %v90 = vld [vmem:[#allocation5 + $0x38] sm:$0xff]
    %v91 = vld [vmem:[#allocation5 + $0x40] sm:$0xff]
    %v92 = vld [vmem:[#allocation5 + $0x48] sm:$0xff]
    %v93 = vld [vmem:[#allocation5 + $0x50] sm:$0xff]
    %v94 = vld [vmem:[#allocation5 + $0x58] sm:$0xff]
    %v95 = vld [vmem:[#allocation5 + $0x60] sm:$0xff]
    %v96 = vld [vmem:[#allocation5 + $0x68] sm:$0xff]
    %v97 = vld [vmem:[#allocation5 + $0x70] sm:$0xff]
    %v98 = vld [vmem:[#allocation5 + $0x78] sm:$0xff]
    %v99 = vld [vmem:[#allocation5 + $0x80] sm:$0xff]
    %v100 = vld [vmem:[#allocation5 + $0x88] sm:$0xff]
    %v101 = vld [vmem:[#allocation5 + $0x90] sm:$0xff]
    %v102 = vld [vmem:[#allocation5 + $0x98] sm:$0xff]
    %v103 = vld [vmem:[#allocation5 + $0xa0] sm:$0xff]
    %v104 = vld [vmem:[#allocation5 + $0xa8] sm:$0xff]
    %v105 = vld [vmem:[#allocation5 + $0xb0] sm:$0xff]
    %v106 = vld [vmem:[#allocation5 + $0xb8] sm:$0xff]
    %v107 = vld [vmem:[#allocation5 + $0xc0] sm:$0xff]
    %v108 = vld [vmem:[#allocation5 + $0xc8] sm:$0xff]
    %v109 = vld [vmem:[#allocation5 + $0xd0] sm:$0xff]
    %v110 = vld [vmem:[#allocation5 + $0xd8] sm:$0xff]
    %v111 = vld [vmem:[#allocation5 + $0xe0] sm:$0xff]
    %v112 = vld [vmem:[#allocation5 + $0xe8] sm:$0xff]
    %v113 = vld [vmem:[#allocation5 + $0xf0] sm:$0xff]
    %v114 = vld [vmem:[#allocation5 + $0xf8] sm:$0xff]
    %v115 = vld [vmem:[#allocation5 + $0x100] sm:$0xff]
    %v116 = vld [vmem:[#allocation5 + $0x108] sm:$0xff]
    %v117 = vld [vmem:[#allocation5 + $0x110] sm:$0xff]
    %v118 = vld [vmem:[#allocation5 + $0x118] sm:$0xff]
    %v119 = vld [vmem:[#allocation5 + $0x120] sm:$0xff]
    %v120 = vld [vmem:[#allocation5 + $0x128] sm:$0xff]
    %v121 = vld [vmem:[#allocation5 + $0x130] sm:$0xff]
    %v122 = vld [vmem:[#allocation5 + $0x138] sm:$0xff]
    %v123 = vld [vmem:[#allocation5 + $0x140] sm:$0xff]
    %v124 = vld [vmem:[#allocation5 + $0x148] sm:$0xff]
    %v125 = vld [vmem:[#allocation5 + $0x150] sm:$0xff]
    %v126 = vld [vmem:[#allocation5 + $0x158] sm:$0xff]
    %v127 = vld [vmem:[#allocation5 + $0x160] sm:$0xff]
    %v128 = vld [vmem:[#allocation5 + $0x168] sm:$0xff]
    %v129 = vld [vmem:[#allocation5 + $0x170] sm:$0xff]
    %v130 = vld [vmem:[#allocation5 + $0x178] sm:$0xff]
    %v131 = vld [vmem:[#allocation5 + $0x180] sm:$0xff]
    %v132 = vld [vmem:[#allocation5 + $0x188] sm:$0xff]
    %v133 = vld [vmem:[#allocation5 + $0x190] sm:$0xff]
    %v134 = vld [vmem:[#allocation5 + $0x198] sm:$0xff]
    %v135 = vld [vmem:[#allocation5 + $0x1a0] sm:$0xff]
    %v136 = vld [vmem:[#allocation5 + $0x1a8] sm:$0xff]
    %v137 = vld [vmem:[#allocation5 + $0x1b0] sm:$0xff]
    %v138 = vld [vmem:[#allocation5 + $0x1b8] sm:$0xff]
    %v139 = vld [vmem:[#allocation5 + $0x1c0] sm:$0xff]
    %v140 = vld [vmem:[#allocation5 + $0x1c8] sm:$0xff]
    %v141 = vld [vmem:[#allocation5 + $0x1d0] sm:$0xff]
    %v142 = vld [vmem:[#allocation5 + $0x1d8] sm:$0xff]
    %v143 = vld [vmem:[#allocation5 + $0x1e0] sm:$0xff]
    %v144 = vld [vmem:[#allocation5 + $0x1e8] sm:$0xff]
    %v145 = vld [vmem:[#allocation5 + $0x1f0] sm:$0xff]
    %v146 = vld [vmem:[#allocation5 + $0x1f8] sm:$0xff]
    %v147 = vld [vmem:[#allocation5 + $0x200] sm:$0xff]
    %v148 = vld [vmem:[#allocation5 + $0x208] sm:$0xff]
    %v149 = vld [vmem:[#allocation5 + $0x210] sm:$0xff]
    %v150 = vld [vmem:[#allocation5 + $0x218] sm:$0xff]
    %v151 = vld [vmem:[#allocation5 + $0x220] sm:$0xff]
    %v152 = vld [vmem:[#allocation5 + $0x228] sm:$0xff]
    %v153 = vld [vmem:[#allocation5 + $0x230] sm:$0xff]
    %v154 = vld [vmem:[#allocation5 + $0x238] sm:$0xff]
    %v155 = vld [vmem:[#allocation5 + $0x240] sm:$0xff]
    %v156 = vld [vmem:[#allocation5 + $0x248] sm:$0xff]
    %v157 = vld [vmem:[#allocation5 + $0x250] sm:$0xff]
    %v158 = vld [vmem:[#allocation5 + $0x258] sm:$0xff]
    %v159 = vld [vmem:[#allocation5 + $0x260] sm:$0xff]
    %v160 = vld [vmem:[#allocation5 + $0x268] sm:$0xff]
    %v161 = vld [vmem:[#allocation5 + $0x270] sm:$0xff]
    %v162 = vld [vmem:[#allocation5 + $0x278] sm:$0xff]
    %v163 = vld [vmem:[#allocation5 + $0x280] sm:$0xff]
    %v164 = vld [vmem:[#allocation5 + $0x288] sm:$0xff]
    %v165 = vld [vmem:[#allocation5 + $0x290] sm:$0xff]
    %v166 = vld [vmem:[#allocation5 + $0x298] sm:$0xff]
    %v167 = vld [vmem:[#allocation5 + $0x2a0] sm:$0xff]
    %v168 = vld [vmem:[#allocation5 + $0x2a8] sm:$0xff]
    %v169 = vld [vmem:[#allocation5 + $0x2b0] sm:$0xff]
    %v170 = vld [vmem:[#allocation5 + $0x2b8] sm:$0xff]
    %v171 = vld [vmem:[#allocation5 + $0x2c0] sm:$0xff]
    %v172 = vld [vmem:[#allocation5 + $0x2c8] sm:$0xff]
    %v173 = vld [vmem:[#allocation5 + $0x2d0] sm:$0xff]
    %v174 = vld [vmem:[#allocation5 + $0x2d8] sm:$0xff]
    %v175 = vld [vmem:[#allocation5 + $0x2e0] sm:$0xff]
    %v176 = vld [vmem:[#allocation5 + $0x2e8] sm:$0xff]
    %v177 = vld [vmem:[#allocation5 + $0x2f0] sm:$0xff]
    %v178 = vld [vmem:[#allocation5 + $0x2f8] sm:$0xff]
    %v179 = vld [vmem:[#allocation5 + $0x300] sm:$0xff]
    %v180 = vld [vmem:[#allocation5 + $0x308] sm:$0xff]
    %v181 = vld [vmem:[#allocation5 + $0x310] sm:$0xff]
    %v182 = vld [vmem:[#allocation5 + $0x318] sm:$0xff]
    %v183 = vld [vmem:[#allocation5 + $0x320] sm:$0xff]
    %v184 = vld [vmem:[#allocation5 + $0x328] sm:$0xff]
    %v185 = vld [vmem:[#allocation5 + $0x330] sm:$0xff]
    %v186 = vld [vmem:[#allocation5 + $0x338] sm:$0xff]
    %v187 = vld [vmem:[#allocation5 + $0x340] sm:$0xff]
    %v188 = vld [vmem:[#allocation5 + $0x348] sm:$0xff]
    %v189 = vld [vmem:[#allocation5 + $0x350] sm:$0xff]
    %v190 = vld [vmem:[#allocation5 + $0x358] sm:$0xff]
    %v191 = vld [vmem:[#allocation5 + $0x360] sm:$0xff]
    %v192 = vld [vmem:[#allocation5 + $0x368] sm:$0xff]
    %v193 = vld [vmem:[#allocation5 + $0x370] sm:$0xff]
    %v194 = vld [vmem:[#allocation5 + $0x378] sm:$0xff]
    %v195 = vld [vmem:[#allocation5 + $0x380] sm:$0xff]
    %v196 = vld [vmem:[#allocation5 + $0x388] sm:$0xff]
    %v197 = vld [vmem:[#allocation5 + $0x390] sm:$0xff]
    %v198 = vld [vmem:[#allocation5 + $0x398] sm:$0xff]
    %v199 = vld [vmem:[#allocation5 + $0x3a0] sm:$0xff]
    %v200 = vld [vmem:[#allocation5 + $0x3a8] sm:$0xff]
    %v201 = vld [vmem:[#allocation5 + $0x3b0] sm:$0xff]
    %v202 = vld [vmem:[#allocation5 + $0x3b8] sm:$0xff]
    %v203 = vld [vmem:[#allocation5 + $0x3c0] sm:$0xff]
    %v204 = vld [vmem:[#allocation5 + $0x3c8] sm:$0xff]
    %v205 = vld [vmem:[#allocation5 + $0x3d0] sm:$0xff]
    %v206 = vld [vmem:[#allocation5 + $0x3d8] sm:$0xff]
    %v207 = vld [vmem:[#allocation5 + $0x3e0] sm:$0xff]
    %v208 = vld [vmem:[#allocation5 + $0x3e8] sm:$0xff]
    %v209 = vld [vmem:[#allocation5 + $0x3f0] sm:$0xff]
    %v210 = vld [vmem:[#allocation5 + $0x3f8] sm:$0xff]
    %v211 = vld [vmem:[#allocation5 + $0x400] sm:$0xff]
    %v212 = vld [vmem:[#allocation5 + $0x408] sm:$0xff]
    %v213 = vld [vmem:[#allocation5 + $0x410] sm:$0xff]
    %v214 = vld [vmem:[#allocation5 + $0x418] sm:$0xff]
    %v215 = vld [vmem:[#allocation5 + $0x420] sm:$0xff]
    %v216 = vld [vmem:[#allocation5 + $0x428] sm:$0xff]
    %v217 = vld [vmem:[#allocation5 + $0x430] sm:$0xff]
    %v218 = vld [vmem:[#allocation5 + $0x438] sm:$0xff]
    %v219 = vld [vmem:[#allocation5 + $0x440] sm:$0xff]
    %v220 = vld [vmem:[#allocation5 + $0x448] sm:$0xff]
    %v221 = vld [vmem:[#allocation5 + $0x450] sm:$0xff]
    %v222 = vld [vmem:[#allocation5 + $0x458] sm:$0xff]
    %v223 = vld [vmem:[#allocation5 + $0x460] sm:$0xff]
    %v224 = vld [vmem:[#allocation5 + $0x468] sm:$0xff]
    %v225 = vld [vmem:[#allocation5 + $0x470] sm:$0xff]
    %v226 = vld [vmem:[#allocation5 + $0x478] sm:$0xff]
    %v227 = vld [vmem:[#allocation5 + $0x480] sm:$0xff]
    %v228 = vld [vmem:[#allocation5 + $0x488] sm:$0xff]
    %v229 = vld [vmem:[#allocation5 + $0x490] sm:$0xff]
    %v230 = vld [vmem:[#allocation5 + $0x498] sm:$0xff]
    %v231 = vld [vmem:[#allocation5 + $0x4a0] sm:$0xff]
    %v232 = vld [vmem:[#allocation5 + $0x4a8] sm:$0xff]
    %v233 = vld [vmem:[#allocation5 + $0x4b0] sm:$0xff]
    %v234 = vld [vmem:[#allocation5 + $0x4b8] sm:$0xff]
    %v235 = vld [vmem:[#allocation5 + $0x4c0] sm:$0xff]
    %v236 = vld [vmem:[#allocation5 + $0x4c8] sm:$0xff]
    %v237 = vld [vmem:[#allocation5 + $0x4d0] sm:$0xff]
    %v238 = vld [vmem:[#allocation5 + $0x4d8] sm:$0xff]
    %v239 = vld [vmem:[#allocation5 + $0x4e0] sm:$0xff]
    %v240 = vld [vmem:[#allocation5 + $0x4e8] sm:$0xff]
    %v241 = vld [vmem:[#allocation5 + $0x4f0] sm:$0xff]
    %v242 = vld [vmem:[#allocation5 + $0x4f8] sm:$0xff]
    %v243 = vld [vmem:[#allocation5 + $0x500] sm:$0xff]
    %v244 = vld [vmem:[#allocation5 + $0x508] sm:$0xff]
    %v245 = vld [vmem:[#allocation5 + $0x510] sm:$0xff]
    %v246 = vld [vmem:[#allocation5 + $0x518] sm:$0xff]
    %v247 = vld [vmem:[#allocation5 + $0x520] sm:$0xff]
    %v248 = vld [vmem:[#allocation5 + $0x528] sm:$0xff]
    %v249 = vld [vmem:[#allocation5 + $0x530] sm:$0xff]
    %v250 = vld [vmem:[#allocation5 + $0x538] sm:$0xff]
    %v251 = vld [vmem:[#allocation5 + $0x540] sm:$0xff]
    %v252 = vld [vmem:[#allocation5 + $0x548] sm:$0xff]
    %v253 = vld [vmem:[#allocation5 + $0x550] sm:$0xff]
    %v254 = vld [vmem:[#allocation5 + $0x558] sm:$0xff]
    %v255 = vld [vmem:[#allocation5 + $0x560] sm:$0xff]
    %v256 = vld [vmem:[#allocation5 + $0x568] sm:$0xff]
    %v257 = vld [vmem:[#allocation5 + $0x570] sm:$0xff]
    %v258 = vld [vmem:[#allocation5 + $0x578] sm:$0xff]
    %v259 = vld [vmem:[#allocation5 + $0x580] sm:$0xff]
    %v260 = vld [vmem:[#allocation5 + $0x588] sm:$0xff]
    %v261 = vld [vmem:[#allocation5 + $0x590] sm:$0xff]
    %v262 = vld [vmem:[#allocation5 + $0x598] sm:$0xff]
    %v263 = vld [vmem:[#allocation5 + $0x5a0] sm:$0xff]
    %v264 = vld [vmem:[#allocation5 + $0x5a8] sm:$0xff]
    %v265 = vld [vmem:[#allocation5 + $0x5b0] sm:$0xff]
    %v266 = vld [vmem:[#allocation5 + $0x5b8] sm:$0xff]
    %v267 = vld [vmem:[#allocation5 + $0x5c0] sm:$0xff]
    %v268 = vld [vmem:[#allocation5 + $0x5c8] sm:$0xff]
    %v269 = vld [vmem:[#allocation5 + $0x5d0] sm:$0xff]
    %v270 = vld [vmem:[#allocation5 + $0x5d8] sm:$0xff]
    %v271 = vld [vmem:[#allocation5 + $0x5e0] sm:$0xff]
    %v272 = vld [vmem:[#allocation5 + $0x5e8] sm:$0xff]
    %v273 = vld [vmem:[#allocation5 + $0x5f0] sm:$0xff]
    %v274 = vld [vmem:[#allocation5 + $0x5f8] sm:$0xff]
    %v275 = vld [vmem:[#allocation5 + $0x600] sm:$0xff]
    %v276 = vld [vmem:[#allocation5 + $0x608] sm:$0xff]
    %v277 = vld [vmem:[#allocation5 + $0x610] sm:$0xff]
    %v278 = vld [vmem:[#allocation5 + $0x618] sm:$0xff]
    %v279 = vld [vmem:[#allocation5 + $0x620] sm:$0xff]
    %v280 = vld [vmem:[#allocation5 + $0x628] sm:$0xff]
    %v281 = vld [vmem:[#allocation5 + $0x630] sm:$0xff]
    %v282 = vld [vmem:[#allocation5 + $0x638] sm:$0xff]
    %v283 = vld [vmem:[#allocation5 + $0x640] sm:$0xff]
    %v284 = vld [vmem:[#allocation5 + $0x648] sm:$0xff]
    %v285 = vld [vmem:[#allocation5 + $0x650] sm:$0xff]
    %v286 = vld [vmem:[#allocation5 + $0x658] sm:$0xff]
    %v287 = vld [vmem:[#allocation5 + $0x660] sm:$0xff]
    %v288 = vld [vmem:[#allocation5 + $0x668] sm:$0xff]
    %v289 = vld [vmem:[#allocation5 + $0x670] sm:$0xff]
    %v290 = vld [vmem:[#allocation5 + $0x678] sm:$0xff]
    %v291 = vld [vmem:[#allocation5 + $0x680] sm:$0xff]
    %v292 = vld [vmem:[#allocation5 + $0x688] sm:$0xff]
    %v293 = vld [vmem:[#allocation5 + $0x690] sm:$0xff]
    %v294 = vld [vmem:[#allocation5 + $0x698] sm:$0xff]
    %v295 = vld [vmem:[#allocation5 + $0x6a0] sm:$0xff]
    %v296 = vld [vmem:[#allocation5 + $0x6a8] sm:$0xff]
    %v297 = vld [vmem:[#allocation5 + $0x6b0] sm:$0xff]
    %v298 = vld [vmem:[#allocation5 + $0x6b8] sm:$0xff]
    %v299 = vld [vmem:[#allocation5 + $0x6c0] sm:$0xff]
    %v300 = vld [vmem:[#allocation5 + $0x6c8] sm:$0xff]
    %v301 = vld [vmem:[#allocation5 + $0x6d0] sm:$0xff]
    %v302 = vld [vmem:[#allocation5 + $0x6d8] sm:$0xff]
    %v303 = vld [vmem:[#allocation5 + $0x6e0] sm:$0xff]
    %v304 = vld [vmem:[#allocation5 + $0x6e8] sm:$0xff]
    %v305 = vld [vmem:[#allocation5 + $0x6f0] sm:$0xff]
    %v306 = vld [vmem:[#allocation5 + $0x6f8] sm:$0xff]
    %v307 = vld [vmem:[#allocation5 + $0x700] sm:$0xff]
    %v308 = vld [vmem:[#allocation5 + $0x708] sm:$0xff]
    %v309 = vld [vmem:[#allocation5 + $0x710] sm:$0xff]
    %v310 = vld [vmem:[#allocation5 + $0x718] sm:$0xff]
    %v311 = vld [vmem:[#allocation5 + $0x720] sm:$0xff]
    %v312 = vld [vmem:[#allocation5 + $0x728] sm:$0xff]
    %v313 = vld [vmem:[#allocation5 + $0x730] sm:$0xff]
    %v314 = vld [vmem:[#allocation5 + $0x738] sm:$0xff]
    %v315 = vld [vmem:[#allocation5 + $0x740] sm:$0xff]
    %v316 = vld [vmem:[#allocation5 + $0x748] sm:$0xff]
    %v317 = vld [vmem:[#allocation5 + $0x750] sm:$0xff]
    %v318 = vld [vmem:[#allocation5 + $0x758] sm:$0xff]
    %v319 = vld [vmem:[#allocation5 + $0x760] sm:$0xff]
    %v320 = vld [vmem:[#allocation5 + $0x768] sm:$0xff]
    %v321 = vld [vmem:[#allocation5 + $0x770] sm:$0xff]
    %v322 = vld [vmem:[#allocation5 + $0x778] sm:$0xff]
    %v323 = vld [vmem:[#allocation5 + $0x780] sm:$0xff]
    %v324 = vld [vmem:[#allocation5 + $0x788] sm:$0xff]
    %v325 = vld [vmem:[#allocation5 + $0x790] sm:$0xff]
    %v326 = vld [vmem:[#allocation5 + $0x798] sm:$0xff]
    %v327 = vld [vmem:[#allocation5 + $0x7a0] sm:$0xff]
    %v328 = vld [vmem:[#allocation5 + $0x7a8] sm:$0xff]
    %v329 = vld [vmem:[#allocation5 + $0x7b0] sm:$0xff]
    %v330 = vld [vmem:[#allocation5 + $0x7b8] sm:$0xff]
    %v331 = vld [vmem:[#allocation5 + $0x7c0] sm:$0xff]
    %v332 = vld [vmem:[#allocation5 + $0x7c8] sm:$0xff]
    %v333 = vld [vmem:[#allocation5 + $0x7d0] sm:$0xff]
    %v334 = vld [vmem:[#allocation5 + $0x7d8] sm:$0xff]
    %v335 = vld [vmem:[#allocation5 + $0x7e0] sm:$0xff]
    %v336 = vld [vmem:[#allocation5 + $0x7e8] sm:$0xff]
    %v337 = vld [vmem:[#allocation5 + $0x7f0] sm:$0xff]
    %v338 = vld [vmem:[#allocation5 + $0x7f8] sm:$0xff]
    %v339 = vld [vmem:[%s2] sm:$0xf]
    %v341 = vlaneseq
    %v342 = vshrl.u32 %v341, 7
    %v343 = vsub.s32 0, %v342
    %v344 = vrot.slane %v339, %v343
    %v345 = vlaneseq
    %v346 = vshrl.u32 %v345, 7
    %v347 = vsub.s32 1, %v346
    %v348 = vrot.slane %v339, %v347
    %v349 = vlaneseq
    %v350 = vshrl.u32 %v349, 7
    %v351 = vsub.s32 2, %v350
    %v352 = vrot.slane %v339, %v351
    %v353 = vlaneseq
    %v354 = vshrl.u32 %v353, 7
    %v355 = vsub.s32 3, %v354
    %v356 = vrot.slane %v339, %v355
    %v617 = vunpack.c.l.b16 %v83
    %v618 = vunpack.c.h.b16 %v83
    %v619 = vunpack.c.l.b16 %v84
    %v620 = vunpack.c.h.b16 %v84
    %v621 = vunpack.c.l.b16 %v85
    %v622 = vunpack.c.h.b16 %v85
    %v623 = vunpack.c.l.b16 %v86
    %v624 = vunpack.c.h.b16 %v86
    %v625 = vunpack.c.l.b16 %v87
    %v626 = vunpack.c.h.b16 %v87
    %v627 = vunpack.c.l.b16 %v88
    %v628 = vunpack.c.h.b16 %v88
    %v629 = vunpack.c.l.b16 %v89
    %v630 = vunpack.c.h.b16 %v89
    %v631 = vunpack.c.l.b16 %v90
    %v632 = vunpack.c.h.b16 %v90
    %v633 = vunpack.c.l.b16 %v91
    %v634 = vunpack.c.h.b16 %v91
    %v635 = vunpack.c.l.b16 %v92
    %v636 = vunpack.c.h.b16 %v92
    %v637 = vunpack.c.l.b16 %v93
    %v638 = vunpack.c.h.b16 %v93
    %v639 = vunpack.c.l.b16 %v94
    %v640 = vunpack.c.h.b16 %v94
    %v641 = vunpack.c.l.b16 %v95
    %v642 = vunpack.c.h.b16 %v95
    %v643 = vunpack.c.l.b16 %v96
    %v644 = vunpack.c.h.b16 %v96
    %v645 = vunpack.c.l.b16 %v97
    %v646 = vunpack.c.h.b16 %v97
    %v647 = vunpack.c.l.b16 %v98
    %v648 = vunpack.c.h.b16 %v98
    %v649 = vunpack.c.l.b16 %v99
    %v650 = vunpack.c.h.b16 %v99
    %v651 = vunpack.c.l.b16 %v100
    %v652 = vunpack.c.h.b16 %v100
    %v653 = vunpack.c.l.b16 %v101
    %v654 = vunpack.c.h.b16 %v101
    %v655 = vunpack.c.l.b16 %v102
    %v656 = vunpack.c.h.b16 %v102
    %v657 = vunpack.c.l.b16 %v103
    %v658 = vunpack.c.h.b16 %v103
    %v659 = vunpack.c.l.b16 %v104
    %v660 = vunpack.c.h.b16 %v104
    %v661 = vunpack.c.l.b16 %v105
    %v662 = vunpack.c.h.b16 %v105
    %v663 = vunpack.c.l.b16 %v106
    %v664 = vunpack.c.h.b16 %v106
    %v665 = vunpack.c.l.b16 %v107
    %v666 = vunpack.c.h.b16 %v107
    %v667 = vunpack.c.l.b16 %v108
    %v668 = vunpack.c.h.b16 %v108
    %v669 = vunpack.c.l.b16 %v109
    %v670 = vunpack.c.h.b16 %v109
    %v671 = vunpack.c.l.b16 %v110
    %v672 = vunpack.c.h.b16 %v110
    %v673 = vunpack.c.l.b16 %v111
    %v674 = vunpack.c.h.b16 %v111
    %v675 = vunpack.c.l.b16 %v112
    %v676 = vunpack.c.h.b16 %v112
    %v677 = vunpack.c.l.b16 %v113
    %v678 = vunpack.c.h.b16 %v113
    %v679 = vunpack.c.l.b16 %v114
    %v680 = vunpack.c.h.b16 %v114
    %v681 = vunpack.c.l.b16 %v115
    %v682 = vunpack.c.h.b16 %v115
    %v683 = vunpack.c.l.b16 %v116
    %v684 = vunpack.c.h.b16 %v116
    %v685 = vunpack.c.l.b16 %v117
    %v686 = vunpack.c.h.b16 %v117
    %v687 = vunpack.c.l.b16 %v118
    %v688 = vunpack.c.h.b16 %v118
    %v689 = vunpack.c.l.b16 %v119
    %v690 = vunpack.c.h.b16 %v119
    %v691 = vunpack.c.l.b16 %v120
    %v692 = vunpack.c.h.b16 %v120
    %v693 = vunpack.c.l.b16 %v121
    %v694 = vunpack.c.h.b16 %v121
    %v695 = vunpack.c.l.b16 %v122
    %v696 = vunpack.c.h.b16 %v122
    %v697 = vunpack.c.l.b16 %v123
    %v698 = vunpack.c.h.b16 %v123
    %v699 = vunpack.c.l.b16 %v124
    %v700 = vunpack.c.h.b16 %v124
    %v701 = vunpack.c.l.b16 %v125
    %v702 = vunpack.c.h.b16 %v125
    %v703 = vunpack.c.l.b16 %v126
    %v704 = vunpack.c.h.b16 %v126
    %v705 = vunpack.c.l.b16 %v127
    %v706 = vunpack.c.h.b16 %v127
    %v707 = vunpack.c.l.b16 %v128
    %v708 = vunpack.c.h.b16 %v128
    %v709 = vunpack.c.l.b16 %v129
    %v710 = vunpack.c.h.b16 %v129
    %v711 = vunpack.c.l.b16 %v130
    %v712 = vunpack.c.h.b16 %v130
    %v713 = vunpack.c.l.b16 %v131
    %v714 = vunpack.c.h.b16 %v131
    %v715 = vunpack.c.l.b16 %v132
    %v716 = vunpack.c.h.b16 %v132
    %v717 = vunpack.c.l.b16 %v133
    %v718 = vunpack.c.h.b16 %v133
    %v719 = vunpack.c.l.b16 %v134
    %v720 = vunpack.c.h.b16 %v134
    %v721 = vunpack.c.l.b16 %v135
    %v722 = vunpack.c.h.b16 %v135
    %v723 = vunpack.c.l.b16 %v136
    %v724 = vunpack.c.h.b16 %v136
    %v725 = vunpack.c.l.b16 %v137
    %v726 = vunpack.c.h.b16 %v137
    %v727 = vunpack.c.l.b16 %v138
    %v728 = vunpack.c.h.b16 %v138
    %v729 = vunpack.c.l.b16 %v139
    %v730 = vunpack.c.h.b16 %v139
    %v731 = vunpack.c.l.b16 %v140
    %v732 = vunpack.c.h.b16 %v140
    %v733 = vunpack.c.l.b16 %v141
    %v734 = vunpack.c.h.b16 %v141
    %v735 = vunpack.c.l.b16 %v142
    %v736 = vunpack.c.h.b16 %v142
    %v737 = vunpack.c.l.b16 %v143
    %v738 = vunpack.c.h.b16 %v143
    %v739 = vunpack.c.l.b16 %v144
    %v740 = vunpack.c.h.b16 %v144
    %v741 = vunpack.c.l.b16 %v145
    %v742 = vunpack.c.h.b16 %v145
    %v743 = vunpack.c.l.b16 %v146
    %v744 = vunpack.c.h.b16 %v146
    %v745 = vunpack.c.l.b16 %v147
    %v746 = vunpack.c.h.b16 %v147
    %v747 = vunpack.c.l.b16 %v148
    %v748 = vunpack.c.h.b16 %v148
    %v749 = vunpack.c.l.b16 %v149
    %v750 = vunpack.c.h.b16 %v149
    %v751 = vunpack.c.l.b16 %v150
    %v752 = vunpack.c.h.b16 %v150
    %v753 = vunpack.c.l.b16 %v151
    %v754 = vunpack.c.h.b16 %v151
    %v755 = vunpack.c.l.b16 %v152
    %v756 = vunpack.c.h.b16 %v152
    %v757 = vunpack.c.l.b16 %v153
    %v758 = vunpack.c.h.b16 %v153
    %v759 = vunpack.c.l.b16 %v154
    %v760 = vunpack.c.h.b16 %v154
    %v761 = vunpack.c.l.b16 %v155
    %v762 = vunpack.c.h.b16 %v155
    %v763 = vunpack.c.l.b16 %v156
    %v764 = vunpack.c.h.b16 %v156
    %v765 = vunpack.c.l.b16 %v157
    %v766 = vunpack.c.h.b16 %v157
    %v767 = vunpack.c.l.b16 %v158
    %v768 = vunpack.c.h.b16 %v158
    %v769 = vunpack.c.l.b16 %v159
    %v770 = vunpack.c.h.b16 %v159
    %v771 = vunpack.c.l.b16 %v160
    %v772 = vunpack.c.h.b16 %v160
    %v773 = vunpack.c.l.b16 %v161
    %v774 = vunpack.c.h.b16 %v161
    %v775 = vunpack.c.l.b16 %v162
    %v776 = vunpack.c.h.b16 %v162
    %v777 = vunpack.c.l.b16 %v163
    %v778 = vunpack.c.h.b16 %v163
    %v779 = vunpack.c.l.b16 %v164
    %v780 = vunpack.c.h.b16 %v164
    %v781 = vunpack.c.l.b16 %v165
    %v782 = vunpack.c.h.b16 %v165
    %v783 = vunpack.c.l.b16 %v166
    %v784 = vunpack.c.h.b16 %v166
    %v785 = vunpack.c.l.b16 %v167
    %v786 = vunpack.c.h.b16 %v167
    %v787 = vunpack.c.l.b16 %v168
    %v788 = vunpack.c.h.b16 %v168
    %v789 = vunpack.c.l.b16 %v169
    %v790 = vunpack.c.h.b16 %v169
    %v791 = vunpack.c.l.b16 %v170
    %v792 = vunpack.c.h.b16 %v170
    %v793 = vunpack.c.l.b16 %v171
    %v794 = vunpack.c.h.b16 %v171
    %v795 = vunpack.c.l.b16 %v172
    %v796 = vunpack.c.h.b16 %v172
    %v797 = vunpack.c.l.b16 %v173
    %v798 = vunpack.c.h.b16 %v173
    %v799 = vunpack.c.l.b16 %v174
    %v800 = vunpack.c.h.b16 %v174
    %v801 = vunpack.c.l.b16 %v175
    %v802 = vunpack.c.h.b16 %v175
    %v803 = vunpack.c.l.b16 %v176
    %v804 = vunpack.c.h.b16 %v176
    %v805 = vunpack.c.l.b16 %v177
    %v806 = vunpack.c.h.b16 %v177
    %v807 = vunpack.c.l.b16 %v178
    %v808 = vunpack.c.h.b16 %v178
    %v809 = vunpack.c.l.b16 %v179
    %v810 = vunpack.c.h.b16 %v179
    %v811 = vunpack.c.l.b16 %v180
    %v812 = vunpack.c.h.b16 %v180
    %v813 = vunpack.c.l.b16 %v181
    %v814 = vunpack.c.h.b16 %v181
    %v815 = vunpack.c.l.b16 %v182
    %v816 = vunpack.c.h.b16 %v182
    %v817 = vunpack.c.l.b16 %v183
    %v818 = vunpack.c.h.b16 %v183
    %v819 = vunpack.c.l.b16 %v184
    %v820 = vunpack.c.h.b16 %v184
    %v821 = vunpack.c.l.b16 %v185
    %v822 = vunpack.c.h.b16 %v185
    %v823 = vunpack.c.l.b16 %v186
    %v824 = vunpack.c.h.b16 %v186
    %v825 = vunpack.c.l.b16 %v187
    %v826 = vunpack.c.h.b16 %v187
    %v827 = vunpack.c.l.b16 %v188
    %v828 = vunpack.c.h.b16 %v188
    %v829 = vunpack.c.l.b16 %v189
    %v830 = vunpack.c.h.b16 %v189
    %v831 = vunpack.c.l.b16 %v190
    %v832 = vunpack.c.h.b16 %v190
    %v833 = vunpack.c.l.b16 %v191
    %v834 = vunpack.c.h.b16 %v191
    %v835 = vunpack.c.l.b16 %v192
    %v836 = vunpack.c.h.b16 %v192
    %v837 = vunpack.c.l.b16 %v193
    %v838 = vunpack.c.h.b16 %v193
    %v839 = vunpack.c.l.b16 %v194
    %v840 = vunpack.c.h.b16 %v194
    %v841 = vunpack.c.l.b16 %v195
    %v842 = vunpack.c.h.b16 %v195
    %v843 = vunpack.c.l.b16 %v196
    %v844 = vunpack.c.h.b16 %v196
    %v845 = vunpack.c.l.b16 %v197
    %v846 = vunpack.c.h.b16 %v197
    %v847 = vunpack.c.l.b16 %v198
    %v848 = vunpack.c.h.b16 %v198
    %v849 = vunpack.c.l.b16 %v199
    %v850 = vunpack.c.h.b16 %v199
    %v851 = vunpack.c.l.b16 %v200
    %v852 = vunpack.c.h.b16 %v200
    %v853 = vunpack.c.l.b16 %v201
    %v854 = vunpack.c.h.b16 %v201
    %v855 = vunpack.c.l.b16 %v202
    %v856 = vunpack.c.h.b16 %v202
    %v857 = vunpack.c.l.b16 %v203
    %v858 = vunpack.c.h.b16 %v203
    %v859 = vunpack.c.l.b16 %v204
    %v860 = vunpack.c.h.b16 %v204
    %v861 = vunpack.c.l.b16 %v205
    %v862 = vunpack.c.h.b16 %v205
    %v863 = vunpack.c.l.b16 %v206
    %v864 = vunpack.c.h.b16 %v206
    %v865 = vunpack.c.l.b16 %v207
    %v866 = vunpack.c.h.b16 %v207
    %v867 = vunpack.c.l.b16 %v208
    %v868 = vunpack.c.h.b16 %v208
    %v869 = vunpack.c.l.b16 %v209
    %v870 = vunpack.c.h.b16 %v209
    %v871 = vunpack.c.l.b16 %v210
    %v872 = vunpack.c.h.b16 %v210
    %v873 = vunpack.c.l.b16 %v211
    %v874 = vunpack.c.h.b16 %v211
    %v875 = vunpack.c.l.b16 %v212
    %v876 = vunpack.c.h.b16 %v212
    %v877 = vunpack.c.l.b16 %v213
    %v878 = vunpack.c.h.b16 %v213
    %v879 = vunpack.c.l.b16 %v214
    %v880 = vunpack.c.h.b16 %v214
    %v881 = vunpack.c.l.b16 %v215
    %v882 = vunpack.c.h.b16 %v215
    %v883 = vunpack.c.l.b16 %v216
    %v884 = vunpack.c.h.b16 %v216
    %v885 = vunpack.c.l.b16 %v217
    %v886 = vunpack.c.h.b16 %v217
    %v887 = vunpack.c.l.b16 %v218
    %v888 = vunpack.c.h.b16 %v218
    %v889 = vunpack.c.l.b16 %v219
    %v890 = vunpack.c.h.b16 %v219
    %v891 = vunpack.c.l.b16 %v220
    %v892 = vunpack.c.h.b16 %v220
    %v893 = vunpack.c.l.b16 %v221
    %v894 = vunpack.c.h.b16 %v221
    %v895 = vunpack.c.l.b16 %v222
    %v896 = vunpack.c.h.b16 %v222
    %v897 = vunpack.c.l.b16 %v223
    %v898 = vunpack.c.h.b16 %v223
    %v899 = vunpack.c.l.b16 %v224
    %v900 = vunpack.c.h.b16 %v224
    %v901 = vunpack.c.l.b16 %v225
    %v902 = vunpack.c.h.b16 %v225
    %v903 = vunpack.c.l.b16 %v226
    %v904 = vunpack.c.h.b16 %v226
    %v905 = vunpack.c.l.b16 %v227
    %v906 = vunpack.c.h.b16 %v227
    %v907 = vunpack.c.l.b16 %v228
    %v908 = vunpack.c.h.b16 %v228
    %v909 = vunpack.c.l.b16 %v229
    %v910 = vunpack.c.h.b16 %v229
    %v911 = vunpack.c.l.b16 %v230
    %v912 = vunpack.c.h.b16 %v230
    %v913 = vunpack.c.l.b16 %v231
    %v914 = vunpack.c.h.b16 %v231
    %v915 = vunpack.c.l.b16 %v232
    %v916 = vunpack.c.h.b16 %v232
    %v917 = vunpack.c.l.b16 %v233
    %v918 = vunpack.c.h.b16 %v233
    %v919 = vunpack.c.l.b16 %v234
    %v920 = vunpack.c.h.b16 %v234
    %v921 = vunpack.c.l.b16 %v235
    %v922 = vunpack.c.h.b16 %v235
    %v923 = vunpack.c.l.b16 %v236
    %v924 = vunpack.c.h.b16 %v236
    %v925 = vunpack.c.l.b16 %v237
    %v926 = vunpack.c.h.b16 %v237
    %v927 = vunpack.c.l.b16 %v238
    %v928 = vunpack.c.h.b16 %v238
    %v929 = vunpack.c.l.b16 %v239
    %v930 = vunpack.c.h.b16 %v239
    %v931 = vunpack.c.l.b16 %v240
    %v932 = vunpack.c.h.b16 %v240
    %v933 = vunpack.c.l.b16 %v241
    %v934 = vunpack.c.h.b16 %v241
    %v935 = vunpack.c.l.b16 %v242
    %v936 = vunpack.c.h.b16 %v242
    %v937 = vunpack.c.l.b16 %v243
    %v938 = vunpack.c.h.b16 %v243
    %v939 = vunpack.c.l.b16 %v244
    %v940 = vunpack.c.h.b16 %v244
    %v941 = vunpack.c.l.b16 %v245
    %v942 = vunpack.c.h.b16 %v245
    %v943 = vunpack.c.l.b16 %v246
    %v944 = vunpack.c.h.b16 %v246
    %v945 = vunpack.c.l.b16 %v247
    %v946 = vunpack.c.h.b16 %v247
    %v947 = vunpack.c.l.b16 %v248
    %v948 = vunpack.c.h.b16 %v248
    %v949 = vunpack.c.l.b16 %v249
    %v950 = vunpack.c.h.b16 %v249
    %v951 = vunpack.c.l.b16 %v250
    %v952 = vunpack.c.h.b16 %v250
    %v953 = vunpack.c.l.b16 %v251
    %v954 = vunpack.c.h.b16 %v251
    %v955 = vunpack.c.l.b16 %v252
    %v956 = vunpack.c.h.b16 %v252
    %v957 = vunpack.c.l.b16 %v253
    %v958 = vunpack.c.h.b16 %v253
    %v959 = vunpack.c.l.b16 %v254
    %v960 = vunpack.c.h.b16 %v254
    %v961 = vunpack.c.l.b16 %v255
    %v962 = vunpack.c.h.b16 %v255
    %v963 = vunpack.c.l.b16 %v256
    %v964 = vunpack.c.h.b16 %v256
    %v965 = vunpack.c.l.b16 %v257
    %v966 = vunpack.c.h.b16 %v257
    %v967 = vunpack.c.l.b16 %v258
    %v968 = vunpack.c.h.b16 %v258
    %v969 = vunpack.c.l.b16 %v259
    %v970 = vunpack.c.h.b16 %v259
    %v971 = vunpack.c.l.b16 %v260
    %v972 = vunpack.c.h.b16 %v260
    %v973 = vunpack.c.l.b16 %v261
    %v974 = vunpack.c.h.b16 %v261
    %v975 = vunpack.c.l.b16 %v262
    %v976 = vunpack.c.h.b16 %v262
    %v977 = vunpack.c.l.b16 %v263
    %v978 = vunpack.c.h.b16 %v263
    %v979 = vunpack.c.l.b16 %v264
    %v980 = vunpack.c.h.b16 %v264
    %v981 = vunpack.c.l.b16 %v265
    %v982 = vunpack.c.h.b16 %v265
    %v983 = vunpack.c.l.b16 %v266
    %v984 = vunpack.c.h.b16 %v266
    %v985 = vunpack.c.l.b16 %v267
    %v986 = vunpack.c.h.b16 %v267
    %v987 = vunpack.c.l.b16 %v268
    %v988 = vunpack.c.h.b16 %v268
    %v989 = vunpack.c.l.b16 %v269
    %v990 = vunpack.c.h.b16 %v269
    %v991 = vunpack.c.l.b16 %v270
    %v992 = vunpack.c.h.b16 %v270
    %v993 = vunpack.c.l.b16 %v271
    %v994 = vunpack.c.h.b16 %v271
    %v995 = vunpack.c.l.b16 %v272
    %v996 = vunpack.c.h.b16 %v272
    %v997 = vunpack.c.l.b16 %v273
    %v998 = vunpack.c.h.b16 %v273
    %v999 = vunpack.c.l.b16 %v274
    %v1000 = vunpack.c.h.b16 %v274
    %v1001 = vunpack.c.l.b16 %v275
    %v1002 = vunpack.c.h.b16 %v275
    %v1003 = vunpack.c.l.b16 %v276
    %v1004 = vunpack.c.h.b16 %v276
    %v1005 = vunpack.c.l.b16 %v277
    %v1006 = vunpack.c.h.b16 %v277
    %v1007 = vunpack.c.l.b16 %v278
    %v1008 = vunpack.c.h.b16 %v278
    %v1009 = vunpack.c.l.b16 %v279
    %v1010 = vunpack.c.h.b16 %v279
    %v1011 = vunpack.c.l.b16 %v280
    %v1012 = vunpack.c.h.b16 %v280
    %v1013 = vunpack.c.l.b16 %v281
    %v1014 = vunpack.c.h.b16 %v281
    %v1015 = vunpack.c.l.b16 %v282
    %v1016 = vunpack.c.h.b16 %v282
    %v1017 = vunpack.c.l.b16 %v283
    %v1018 = vunpack.c.h.b16 %v283
    %v1019 = vunpack.c.l.b16 %v284
    %v1020 = vunpack.c.h.b16 %v284
    %v1021 = vunpack.c.l.b16 %v285
    %v1022 = vunpack.c.h.b16 %v285
    %v1023 = vunpack.c.l.b16 %v286
    %v1024 = vunpack.c.h.b16 %v286
    %v1025 = vunpack.c.l.b16 %v287
    %v1026 = vunpack.c.h.b16 %v287
    %v1027 = vunpack.c.l.b16 %v288
    %v1028 = vunpack.c.h.b16 %v288
    %v1029 = vunpack.c.l.b16 %v289
    %v1030 = vunpack.c.h.b16 %v289
    %v1031 = vunpack.c.l.b16 %v290
    %v1032 = vunpack.c.h.b16 %v290
    %v1033 = vunpack.c.l.b16 %v291
    %v1034 = vunpack.c.h.b16 %v291
    %v1035 = vunpack.c.l.b16 %v292
    %v1036 = vunpack.c.h.b16 %v292
    %v1037 = vunpack.c.l.b16 %v293
    %v1038 = vunpack.c.h.b16 %v293
    %v1039 = vunpack.c.l.b16 %v294
    %v1040 = vunpack.c.h.b16 %v294
    %v1041 = vunpack.c.l.b16 %v295
    %v1042 = vunpack.c.h.b16 %v295
    %v1043 = vunpack.c.l.b16 %v296
    %v1044 = vunpack.c.h.b16 %v296
    %v1045 = vunpack.c.l.b16 %v297
    %v1046 = vunpack.c.h.b16 %v297
    %v1047 = vunpack.c.l.b16 %v298
    %v1048 = vunpack.c.h.b16 %v298
    %v1049 = vunpack.c.l.b16 %v299
    %v1050 = vunpack.c.h.b16 %v299
    %v1051 = vunpack.c.l.b16 %v300
    %v1052 = vunpack.c.h.b16 %v300
    %v1053 = vunpack.c.l.b16 %v301
    %v1054 = vunpack.c.h.b16 %v301
    %v1055 = vunpack.c.l.b16 %v302
    %v1056 = vunpack.c.h.b16 %v302
    %v1057 = vunpack.c.l.b16 %v303
    %v1058 = vunpack.c.h.b16 %v303
    %v1059 = vunpack.c.l.b16 %v304
    %v1060 = vunpack.c.h.b16 %v304
    %v1061 = vunpack.c.l.b16 %v305
    %v1062 = vunpack.c.h.b16 %v305
    %v1063 = vunpack.c.l.b16 %v306
    %v1064 = vunpack.c.h.b16 %v306
    %v1065 = vunpack.c.l.b16 %v307
    %v1066 = vunpack.c.h.b16 %v307
    %v1067 = vunpack.c.l.b16 %v308
    %v1068 = vunpack.c.h.b16 %v308
    %v1069 = vunpack.c.l.b16 %v309
    %v1070 = vunpack.c.h.b16 %v309
    %v1071 = vunpack.c.l.b16 %v310
    %v1072 = vunpack.c.h.b16 %v310
    %v1073 = vunpack.c.l.b16 %v311
    %v1074 = vunpack.c.h.b16 %v311
    %v1075 = vunpack.c.l.b16 %v312
    %v1076 = vunpack.c.h.b16 %v312
    %v1077 = vunpack.c.l.b16 %v313
    %v1078 = vunpack.c.h.b16 %v313
    %v1079 = vunpack.c.l.b16 %v314
    %v1080 = vunpack.c.h.b16 %v314
    %v1081 = vunpack.c.l.b16 %v315
    %v1082 = vunpack.c.h.b16 %v315
    %v1083 = vunpack.c.l.b16 %v316
    %v1084 = vunpack.c.h.b16 %v316
    %v1085 = vunpack.c.l.b16 %v317
    %v1086 = vunpack.c.h.b16 %v317
    %v1087 = vunpack.c.l.b16 %v318
    %v1088 = vunpack.c.h.b16 %v318
    %v1089 = vunpack.c.l.b16 %v319
    %v1090 = vunpack.c.h.b16 %v319
    %v1091 = vunpack.c.l.b16 %v320
    %v1092 = vunpack.c.h.b16 %v320
    %v1093 = vunpack.c.l.b16 %v321
    %v1094 = vunpack.c.h.b16 %v321
    %v1095 = vunpack.c.l.b16 %v322
    %v1096 = vunpack.c.h.b16 %v322
    %v1097 = vunpack.c.l.b16 %v323
    %v1098 = vunpack.c.h.b16 %v323
    %v1099 = vunpack.c.l.b16 %v324
    %v1100 = vunpack.c.h.b16 %v324
    %v1101 = vunpack.c.l.b16 %v325
    %v1102 = vunpack.c.h.b16 %v325
    %v1103 = vunpack.c.l.b16 %v326
    %v1104 = vunpack.c.h.b16 %v326
    %v1105 = vunpack.c.l.b16 %v327
    %v1106 = vunpack.c.h.b16 %v327
    %v1107 = vunpack.c.l.b16 %v328
    %v1108 = vunpack.c.h.b16 %v328
    %v1109 = vunpack.c.l.b16 %v329
    %v1110 = vunpack.c.h.b16 %v329
    %v1111 = vunpack.c.l.b16 %v330
    %v1112 = vunpack.c.h.b16 %v330
    %v1113 = vunpack.c.l.b16 %v331
    %v1114 = vunpack.c.h.b16 %v331
    %v1115 = vunpack.c.l.b16 %v332
    %v1116 = vunpack.c.h.b16 %v332
    %v1117 = vunpack.c.l.b16 %v333
    %v1118 = vunpack.c.h.b16 %v333
    %v1119 = vunpack.c.l.b16 %v334
    %v1120 = vunpack.c.h.b16 %v334
    %v1121 = vunpack.c.l.b16 %v335
    %v1122 = vunpack.c.h.b16 %v335
    %v1123 = vunpack.c.l.b16 %v336
    %v1124 = vunpack.c.h.b16 %v336
    %v1125 = vunpack.c.l.b16 %v337
    %v1126 = vunpack.c.h.b16 %v337
    %v1127 = vunpack.c.l.b16 %v338
    %v1128 = vunpack.c.h.b16 %v338
    %v1129 = vpack.c.b16 %v621, %v617
    %v1130 = vpack.c.b16 %v622, %v618
    %v1131 = vpack.c.b16 %v623, %v619
    %v1132 = vpack.c.b16 %v624, %v620
    %v1133 = vpack.c.b16 %v629, %v625
    %v1134 = vpack.c.b16 %v630, %v626
    %v1135 = vpack.c.b16 %v631, %v627
    %v1136 = vpack.c.b16 %v632, %v628
    %v1137 = vpack.c.b16 %v637, %v633
    %v1138 = vpack.c.b16 %v638, %v634
    %v1139 = vpack.c.b16 %v639, %v635
    %v1140 = vpack.c.b16 %v640, %v636
    %v1141 = vpack.c.b16 %v645, %v641
    %v1142 = vpack.c.b16 %v646, %v642
    %v1143 = vpack.c.b16 %v647, %v643
    %v1144 = vpack.c.b16 %v648, %v644
    %v1145 = vpack.c.b16 %v653, %v649
    %v1146 = vpack.c.b16 %v654, %v650
    %v1147 = vpack.c.b16 %v655, %v651
    %v1148 = vpack.c.b16 %v656, %v652
    %v1149 = vpack.c.b16 %v661, %v657
    %v1150 = vpack.c.b16 %v662, %v658
    %v1151 = vpack.c.b16 %v663, %v659
    %v1152 = vpack.c.b16 %v664, %v660
    %v1153 = vpack.c.b16 %v669, %v665
    %v1154 = vpack.c.b16 %v670, %v666
    %v1155 = vpack.c.b16 %v671, %v667
    %v1156 = vpack.c.b16 %v672, %v668
    %v1157 = vpack.c.b16 %v677, %v673
    %v1158 = vpack.c.b16 %v678, %v674
    %v1159 = vpack.c.b16 %v679, %v675
    %v1160 = vpack.c.b16 %v680, %v676
    %v1161 = vpack.c.b16 %v685, %v681
    %v1162 = vpack.c.b16 %v686, %v682
    %v1163 = vpack.c.b16 %v687, %v683
    %v1164 = vpack.c.b16 %v688, %v684
    %v1165 = vpack.c.b16 %v693, %v689
    %v1166 = vpack.c.b16 %v694, %v690
    %v1167 = vpack.c.b16 %v695, %v691
    %v1168 = vpack.c.b16 %v696, %v692
    %v1169 = vpack.c.b16 %v701, %v697
    %v1170 = vpack.c.b16 %v702, %v698
    %v1171 = vpack.c.b16 %v703, %v699
    %v1172 = vpack.c.b16 %v704, %v700
    %v1173 = vpack.c.b16 %v709, %v705
    %v1174 = vpack.c.b16 %v710, %v706
    %v1175 = vpack.c.b16 %v711, %v707
    %v1176 = vpack.c.b16 %v712, %v708
    %v1177 = vpack.c.b16 %v717, %v713
    %v1178 = vpack.c.b16 %v718, %v714
    %v1179 = vpack.c.b16 %v719, %v715
    %v1180 = vpack.c.b16 %v720, %v716
    %v1181 = vpack.c.b16 %v725, %v721
    %v1182 = vpack.c.b16 %v726, %v722
    %v1183 = vpack.c.b16 %v727, %v723
    %v1184 = vpack.c.b16 %v728, %v724
    %v1185 = vpack.c.b16 %v733, %v729
    %v1186 = vpack.c.b16 %v734, %v730
    %v1187 = vpack.c.b16 %v735, %v731
    %v1188 = vpack.c.b16 %v736, %v732
    %v1189 = vpack.c.b16 %v741, %v737
    %v1190 = vpack.c.b16 %v742, %v738
    %v1191 = vpack.c.b16 %v743, %v739
    %v1192 = vpack.c.b16 %v744, %v740
    %v1193 = vpack.c.b16 %v749, %v745
    %v1194 = vpack.c.b16 %v750, %v746
    %v1195 = vpack.c.b16 %v751, %v747
    %v1196 = vpack.c.b16 %v752, %v748
    %v1197 = vpack.c.b16 %v757, %v753
    %v1198 = vpack.c.b16 %v758, %v754
    %v1199 = vpack.c.b16 %v759, %v755
    %v1200 = vpack.c.b16 %v760, %v756
    %v1201 = vpack.c.b16 %v765, %v761
    %v1202 = vpack.c.b16 %v766, %v762
    %v1203 = vpack.c.b16 %v767, %v763
    %v1204 = vpack.c.b16 %v768, %v764
    %v1205 = vpack.c.b16 %v773, %v769
    %v1206 = vpack.c.b16 %v774, %v770
    %v1207 = vpack.c.b16 %v775, %v771
    %v1208 = vpack.c.b16 %v776, %v772
    %v1209 = vpack.c.b16 %v781, %v777
    %v1210 = vpack.c.b16 %v782, %v778
    %v1211 = vpack.c.b16 %v783, %v779
    %v1212 = vpack.c.b16 %v784, %v780
    %v1213 = vpack.c.b16 %v789, %v785
    %v1214 = vpack.c.b16 %v790, %v786
    %v1215 = vpack.c.b16 %v791, %v787
    %v1216 = vpack.c.b16 %v792, %v788
    %v1217 = vpack.c.b16 %v797, %v793
    %v1218 = vpack.c.b16 %v798, %v794
    %v1219 = vpack.c.b16 %v799, %v795
    %v1220 = vpack.c.b16 %v800, %v796
    %v1221 = vpack.c.b16 %v805, %v801
    %v1222 = vpack.c.b16 %v806, %v802
    %v1223 = vpack.c.b16 %v807, %v803
    %v1224 = vpack.c.b16 %v808, %v804
    %v1225 = vpack.c.b16 %v813, %v809
    %v1226 = vpack.c.b16 %v814, %v810
    %v1227 = vpack.c.b16 %v815, %v811
    %v1228 = vpack.c.b16 %v816, %v812
    %v1229 = vpack.c.b16 %v821, %v817
    %v1230 = vpack.c.b16 %v822, %v818
    %v1231 = vpack.c.b16 %v823, %v819
    %v1232 = vpack.c.b16 %v824, %v820
    %v1233 = vpack.c.b16 %v829, %v825
    %v1234 = vpack.c.b16 %v830, %v826
    %v1235 = vpack.c.b16 %v831, %v827
    %v1236 = vpack.c.b16 %v832, %v828
    %v1237 = vpack.c.b16 %v837, %v833
    %v1238 = vpack.c.b16 %v838, %v834
    %v1239 = vpack.c.b16 %v839, %v835
    %v1240 = vpack.c.b16 %v840, %v836
    %v1241 = vpack.c.b16 %v845, %v841
    %v1242 = vpack.c.b16 %v846, %v842
    %v1243 = vpack.c.b16 %v847, %v843
    %v1244 = vpack.c.b16 %v848, %v844
    %v1245 = vpack.c.b16 %v853, %v849
    %v1246 = vpack.c.b16 %v854, %v850
    %v1247 = vpack.c.b16 %v855, %v851
    %v1248 = vpack.c.b16 %v856, %v852
    %v1249 = vpack.c.b16 %v861, %v857
    %v1250 = vpack.c.b16 %v862, %v858
    %v1251 = vpack.c.b16 %v863, %v859
    %v1252 = vpack.c.b16 %v864, %v860
    %v1253 = vpack.c.b16 %v869, %v865
    %v1254 = vpack.c.b16 %v870, %v866
    %v1255 = vpack.c.b16 %v871, %v867
    %v1256 = vpack.c.b16 %v872, %v868
    %v1257 = vpack.c.b16 %v877, %v873
    %v1258 = vpack.c.b16 %v878, %v874
    %v1259 = vpack.c.b16 %v879, %v875
    %v1260 = vpack.c.b16 %v880, %v876
    %v1261 = vpack.c.b16 %v885, %v881
    %v1262 = vpack.c.b16 %v886, %v882
    %v1263 = vpack.c.b16 %v887, %v883
    %v1264 = vpack.c.b16 %v888, %v884
    %v1265 = vpack.c.b16 %v893, %v889
    %v1266 = vpack.c.b16 %v894, %v890
    %v1267 = vpack.c.b16 %v895, %v891
    %v1268 = vpack.c.b16 %v896, %v892
    %v1269 = vpack.c.b16 %v901, %v897
    %v1270 = vpack.c.b16 %v902, %v898
    %v1271 = vpack.c.b16 %v903, %v899
    %v1272 = vpack.c.b16 %v904, %v900
    %v1273 = vpack.c.b16 %v909, %v905
    %v1274 = vpack.c.b16 %v910, %v906
    %v1275 = vpack.c.b16 %v911, %v907
    %v1276 = vpack.c.b16 %v912, %v908
    %v1277 = vpack.c.b16 %v917, %v913
    %v1278 = vpack.c.b16 %v918, %v914
    %v1279 = vpack.c.b16 %v919, %v915
    %v1280 = vpack.c.b16 %v920, %v916
    %v1281 = vpack.c.b16 %v925, %v921
    %v1282 = vpack.c.b16 %v926, %v922
    %v1283 = vpack.c.b16 %v927, %v923
    %v1284 = vpack.c.b16 %v928, %v924
    %v1285 = vpack.c.b16 %v933, %v929
    %v1286 = vpack.c.b16 %v934, %v930
    %v1287 = vpack.c.b16 %v935, %v931
    %v1288 = vpack.c.b16 %v936, %v932
    %v1289 = vpack.c.b16 %v941, %v937
    %v1290 = vpack.c.b16 %v942, %v938
    %v1291 = vpack.c.b16 %v943, %v939
    %v1292 = vpack.c.b16 %v944, %v940
    %v1293 = vpack.c.b16 %v949, %v945
    %v1294 = vpack.c.b16 %v950, %v946
    %v1295 = vpack.c.b16 %v951, %v947
    %v1296 = vpack.c.b16 %v952, %v948
    %v1297 = vpack.c.b16 %v957, %v953
    %v1298 = vpack.c.b16 %v958, %v954
    %v1299 = vpack.c.b16 %v959, %v955
    %v1300 = vpack.c.b16 %v960, %v956
    %v1301 = vpack.c.b16 %v965, %v961
    %v1302 = vpack.c.b16 %v966, %v962
    %v1303 = vpack.c.b16 %v967, %v963
    %v1304 = vpack.c.b16 %v968, %v964
    %v1305 = vpack.c.b16 %v973, %v969
    %v1306 = vpack.c.b16 %v974, %v970
    %v1307 = vpack.c.b16 %v975, %v971
    %v1308 = vpack.c.b16 %v976, %v972
    %v1309 = vpack.c.b16 %v981, %v977
    %v1310 = vpack.c.b16 %v982, %v978
    %v1311 = vpack.c.b16 %v983, %v979
    %v1312 = vpack.c.b16 %v984, %v980
    %v1313 = vpack.c.b16 %v989, %v985
    %v1314 = vpack.c.b16 %v990, %v986
    %v1315 = vpack.c.b16 %v991, %v987
    %v1316 = vpack.c.b16 %v992, %v988
    %v1317 = vpack.c.b16 %v997, %v993
    %v1318 = vpack.c.b16 %v998, %v994
    %v1319 = vpack.c.b16 %v999, %v995
    %v1320 = vpack.c.b16 %v1000, %v996
    %v1321 = vpack.c.b16 %v1005, %v1001
    %v1322 = vpack.c.b16 %v1006, %v1002
    %v1323 = vpack.c.b16 %v1007, %v1003
    %v1324 = vpack.c.b16 %v1008, %v1004
    %v1325 = vpack.c.b16 %v1013, %v1009
    %v1326 = vpack.c.b16 %v1014, %v1010
    %v1327 = vpack.c.b16 %v1015, %v1011
    %v1328 = vpack.c.b16 %v1016, %v1012
    %v1329 = vpack.c.b16 %v1021, %v1017
    %v1330 = vpack.c.b16 %v1022, %v1018
    %v1331 = vpack.c.b16 %v1023, %v1019
    %v1332 = vpack.c.b16 %v1024, %v1020
    %v1333 = vpack.c.b16 %v1029, %v1025
    %v1334 = vpack.c.b16 %v1030, %v1026
    %v1335 = vpack.c.b16 %v1031, %v1027
    %v1336 = vpack.c.b16 %v1032, %v1028
    %v1337 = vpack.c.b16 %v1037, %v1033
    %v1338 = vpack.c.b16 %v1038, %v1034
    %v1339 = vpack.c.b16 %v1039, %v1035
    %v1340 = vpack.c.b16 %v1040, %v1036
    %v1341 = vpack.c.b16 %v1045, %v1041
    %v1342 = vpack.c.b16 %v1046, %v1042
    %v1343 = vpack.c.b16 %v1047, %v1043
    %v1344 = vpack.c.b16 %v1048, %v1044
    %v1345 = vpack.c.b16 %v1053, %v1049
    %v1346 = vpack.c.b16 %v1054, %v1050
    %v1347 = vpack.c.b16 %v1055, %v1051
    %v1348 = vpack.c.b16 %v1056, %v1052
    %v1349 = vpack.c.b16 %v1061, %v1057
    %v1350 = vpack.c.b16 %v1062, %v1058
    %v1351 = vpack.c.b16 %v1063, %v1059
    %v1352 = vpack.c.b16 %v1064, %v1060
    %v1353 = vpack.c.b16 %v1069, %v1065
    %v1354 = vpack.c.b16 %v1070, %v1066
    %v1355 = vpack.c.b16 %v1071, %v1067
    %v1356 = vpack.c.b16 %v1072, %v1068
    %v1357 = vpack.c.b16 %v1077, %v1073
    %v1358 = vpack.c.b16 %v1078, %v1074
    %v1359 = vpack.c.b16 %v1079, %v1075
    %v1360 = vpack.c.b16 %v1080, %v1076
    %v1361 = vpack.c.b16 %v1085, %v1081
    %v1362 = vpack.c.b16 %v1086, %v1082
    %v1363 = vpack.c.b16 %v1087, %v1083
    %v1364 = vpack.c.b16 %v1088, %v1084
    %v1365 = vpack.c.b16 %v1093, %v1089
    %v1366 = vpack.c.b16 %v1094, %v1090
    %v1367 = vpack.c.b16 %v1095, %v1091
    %v1368 = vpack.c.b16 %v1096, %v1092
    %v1369 = vpack.c.b16 %v1101, %v1097
    %v1370 = vpack.c.b16 %v1102, %v1098
    %v1371 = vpack.c.b16 %v1103, %v1099
    %v1372 = vpack.c.b16 %v1104, %v1100
    %v1373 = vpack.c.b16 %v1109, %v1105
    %v1374 = vpack.c.b16 %v1110, %v1106
    %v1375 = vpack.c.b16 %v1111, %v1107
    %v1376 = vpack.c.b16 %v1112, %v1108
    %v1377 = vpack.c.b16 %v1117, %v1113
    %v1378 = vpack.c.b16 %v1118, %v1114
    %v1379 = vpack.c.b16 %v1119, %v1115
    %v1380 = vpack.c.b16 %v1120, %v1116
    %v1381 = vpack.c.b16 %v1125, %v1121
    %v1382 = vpack.c.b16 %v1126, %v1122
    %v1383 = vpack.c.b16 %v1127, %v1123
    %v1384 = vpack.c.b16 %v1128, %v1124
    %1641 = vmatprep.subr.bf16.mxu0 %v1158
    %1642 = vmatpush1.bf16.msra.mxu0 %v1157
    %1643 = vmatprep.subr.bf16.mxu0 %v1154
    %1644 = vmatpush1.bf16.msra.mxu0 %v1153
    %1645 = vmatprep.subr.bf16.mxu0 %v1150
    %1646 = vmatpush1.bf16.msra.mxu0 %v1149
    %1647 = vmatprep.subr.bf16.mxu0 %v1146
    %1648 = vmatpush1.bf16.msra.mxu0 %v1145
    %1649 = vmatprep.subr.bf16.mxu0 %v1142
    %1650 = vmatpush1.bf16.msra.mxu0 %v1141
    %1651 = vmatprep.subr.bf16.mxu0 %v1138
    %1652 = vmatpush1.bf16.msra.mxu0 %v1137
    %1653 = vmatprep.subr.bf16.mxu0 %v1134
    %1654 = vmatpush1.bf16.msra.mxu0 %v1133
    %1655 = vmatprep.subr.bf16.mxu0 %v1130
    %1656 = vmatpush1.bf16.msra.mxu0 %v1129
    %1657 = vmatprep.subr.bf16.mxu0 %v1190
    %1658 = vmatpush2.bf16.msra.mxu0 %v1189
    %1659 = vmatprep.subr.bf16.mxu0 %v1186
    %1660 = vmatpush2.bf16.msra.mxu0 %v1185
    %1661 = vmatprep.subr.bf16.mxu0 %v1182
    %1662 = vmatpush2.bf16.msra.mxu0 %v1181
    %1663 = vmatprep.subr.bf16.mxu0 %v1178
    %1664 = vmatpush2.bf16.msra.mxu0 %v1177
    %1665 = vmatprep.subr.bf16.mxu0 %v1174
    %1666 = vmatpush2.bf16.msra.mxu0 %v1173
    %1667 = vmatprep.subr.bf16.mxu0 %v1170
    %1668 = vmatpush2.bf16.msra.mxu0 %v1169
    %1669 = vmatprep.subr.bf16.mxu0 %v1166
    %1670 = vmatpush2.bf16.msra.mxu0 %v1165
    %1671 = vmatprep.subr.bf16.mxu0 %v1162
    %1672 = vmatpush2.bf16.msra.mxu0 %v1161
    %1673 = vmatprep.mubr.bf16.mxu0 %v76
    %1674 = vmatmul.mubr.bf16.gmra.mxu0 %v75
    %v1675 = vpop.f32.mrf.mxu0
    %v1676 = vadd.f32 %v344, %v1675
    %v1677 = vpop.f32.mrf.mxu0
    %v1678 = vadd.f32 %v348, %v1677
    %v1679 = vpop.f32.mrf.mxu0
    %v1680 = vpop.f32.mrf.mxu0
    %1681 = vdwg.mxu0
    %1682 = vmatprep.subr.bf16.mxu0 %v1222
    %1683 = vmatpush1.bf16.msra.mxu0 %v1221
    %1684 = vmatprep.subr.bf16.mxu0 %v1218
    %1685 = vmatpush1.bf16.msra.mxu0 %v1217
    %1686 = vmatprep.subr.bf16.mxu0 %v1214
    %1687 = vmatpush1.bf16.msra.mxu0 %v1213
    %1688 = vmatprep.subr.bf16.mxu0 %v1210
    %1689 = vmatpush1.bf16.msra.mxu0 %v1209
    %1690 = vmatprep.subr.bf16.mxu0 %v1206
    %1691 = vmatpush1.bf16.msra.mxu0 %v1205
    %1692 = vmatprep.subr.bf16.mxu0 %v1202
    %1693 = vmatpush1.bf16.msra.mxu0 %v1201
    %1694 = vmatprep.subr.bf16.mxu0 %v1198
    %1695 = vmatpush1.bf16.msra.mxu0 %v1197
    %1696 = vmatprep.subr.bf16.mxu0 %v1194
    %1697 = vmatpush1.bf16.msra.mxu0 %v1193
    %1698 = vmatprep.subr.bf16.mxu0 %v1254
    %1699 = vmatpush2.bf16.msra.mxu0 %v1253
    %1700 = vmatprep.subr.bf16.mxu0 %v1250
    %1701 = vmatpush2.bf16.msra.mxu0 %v1249
    %1702 = vmatprep.subr.bf16.mxu0 %v1246
    %1703 = vmatpush2.bf16.msra.mxu0 %v1245
    %1704 = vmatprep.subr.bf16.mxu0 %v1242
    %1705 = vmatpush2.bf16.msra.mxu0 %v1241
    %1706 = vmatprep.subr.bf16.mxu0 %v1238
    %1707 = vmatpush2.bf16.msra.mxu0 %v1237
    %1708 = vmatprep.subr.bf16.mxu0 %v1234
    %1709 = vmatpush2.bf16.msra.mxu0 %v1233
    %1710 = vmatprep.subr.bf16.mxu0 %v1230
    %1711 = vmatpush2.bf16.msra.mxu0 %v1229
    %1712 = vmatprep.subr.bf16.mxu0 %v1226
    %1713 = vmatpush2.bf16.msra.mxu0 %v1225
    %1714 = vmatprep.mubr.bf16.mxu0 %v78
    %1715 = vmatmul.mubr.bf16.gmra.mxu0 %v77
    %v1716 = vpop.f32.mrf.mxu0
    %v1717 = vadd.f32 %v1676, %v1716
    %v1718 = vpop.f32.mrf.mxu0
    %v1719 = vadd.f32 %v1678, %v1718
    %v1720 = vpop.f32.mrf.mxu0
    %v1721 = vpop.f32.mrf.mxu0
    %1722 = vdwg.mxu0
    %1723 = vmatprep.subr.bf16.mxu0 %v1286
    %1724 = vmatpush1.bf16.msra.mxu0 %v1285
    %1725 = vmatprep.subr.bf16.mxu0 %v1282
    %1726 = vmatpush1.bf16.msra.mxu0 %v1281
    %1727 = vmatprep.subr.bf16.mxu0 %v1278
    %1728 = vmatpush1.bf16.msra.mxu0 %v1277
    %1729 = vmatprep.subr.bf16.mxu0 %v1274
    %1730 = vmatpush1.bf16.msra.mxu0 %v1273
    %1731 = vmatprep.subr.bf16.mxu0 %v1270
    %1732 = vmatpush1.bf16.msra.mxu0 %v1269
    %1733 = vmatprep.subr.bf16.mxu0 %v1266
    %1734 = vmatpush1.bf16.msra.mxu0 %v1265
    %1735 = vmatprep.subr.bf16.mxu0 %v1262
    %1736 = vmatpush1.bf16.msra.mxu0 %v1261
    %1737 = vmatprep.subr.bf16.mxu0 %v1258
    %1738 = vmatpush1.bf16.msra.mxu0 %v1257
    %1739 = vmatprep.subr.bf16.mxu0 %v1318
    %1740 = vmatpush2.bf16.msra.mxu0 %v1317
    %1741 = vmatprep.subr.bf16.mxu0 %v1314
    %1742 = vmatpush2.bf16.msra.mxu0 %v1313
    %1743 = vmatprep.subr.bf16.mxu0 %v1310
    %1744 = vmatpush2.bf16.msra.mxu0 %v1309
    %1745 = vmatprep.subr.bf16.mxu0 %v1306
    %1746 = vmatpush2.bf16.msra.mxu0 %v1305
    %1747 = vmatprep.subr.bf16.mxu0 %v1302
    %1748 = vmatpush2.bf16.msra.mxu0 %v1301
    %1749 = vmatprep.subr.bf16.mxu0 %v1298
    %1750 = vmatpush2.bf16.msra.mxu0 %v1297
    %1751 = vmatprep.subr.bf16.mxu0 %v1294
    %1752 = vmatpush2.bf16.msra.mxu0 %v1293
    %1753 = vmatprep.subr.bf16.mxu0 %v1290
    %1754 = vmatpush2.bf16.msra.mxu0 %v1289
    %1755 = vmatprep.mubr.bf16.mxu0 %v80
    %1756 = vmatmul.mubr.bf16.gmra.mxu0 %v79
    %v1757 = vpop.f32.mrf.mxu0
    %v1758 = vadd.f32 %v1717, %v1757
    %v1759 = vpop.f32.mrf.mxu0
    %v1760 = vadd.f32 %v1719, %v1759
    %v1761 = vpop.f32.mrf.mxu0
    %v1762 = vpop.f32.mrf.mxu0
    %1763 = vdwg.mxu0
    %1764 = vmatprep.subr.bf16.mxu0 %v1350
    %1765 = vmatpush1.bf16.msra.mxu0 %v1349
    %1766 = vmatprep.subr.bf16.mxu0 %v1346
    %1767 = vmatpush1.bf16.msra.mxu0 %v1345
    %1768 = vmatprep.subr.bf16.mxu0 %v1342
    %1769 = vmatpush1.bf16.msra.mxu0 %v1341
    %1770 = vmatprep.subr.bf16.mxu0 %v1338
    %1771 = vmatpush1.bf16.msra.mxu0 %v1337
    %1772 = vmatprep.subr.bf16.mxu0 %v1334
    %1773 = vmatpush1.bf16.msra.mxu0 %v1333
    %1774 = vmatprep.subr.bf16.mxu0 %v1330
    %1775 = vmatpush1.bf16.msra.mxu0 %v1329
    %1776 = vmatprep.subr.bf16.mxu0 %v1326
    %1777 = vmatpush1.bf16.msra.mxu0 %v1325
    %1778 = vmatprep.subr.bf16.mxu0 %v1322
    %1779 = vmatpush1.bf16.msra.mxu0 %v1321
    %1780 = vmatprep.subr.bf16.mxu0 %v1382
    %1781 = vmatpush2.bf16.msra.mxu0 %v1381
    %1782 = vmatprep.subr.bf16.mxu0 %v1378
    %1783 = vmatpush2.bf16.msra.mxu0 %v1377
    %1784 = vmatprep.subr.bf16.mxu0 %v1374
    %1785 = vmatpush2.bf16.msra.mxu0 %v1373
    %1786 = vmatprep.subr.bf16.mxu0 %v1370
    %1787 = vmatpush2.bf16.msra.mxu0 %v1369
    %1788 = vmatprep.subr.bf16.mxu0 %v1366
    %1789 = vmatpush2.bf16.msra.mxu0 %v1365
    %1790 = vmatprep.subr.bf16.mxu0 %v1362
    %1791 = vmatpush2.bf16.msra.mxu0 %v1361
    %1792 = vmatprep.subr.bf16.mxu0 %v1358
    %1793 = vmatpush2.bf16.msra.mxu0 %v1357
    %1794 = vmatprep.subr.bf16.mxu0 %v1354
    %1795 = vmatpush2.bf16.msra.mxu0 %v1353
    %1796 = vmatprep.mubr.bf16.mxu0 %v82
    %1797 = vmatmul.mubr.bf16.gmra.mxu0 %v81
    %v1798 = vpop.f32.mrf.mxu0
    %v1799 = vadd.f32 %v1758, %v1798
    %v1800 = vpop.f32.mrf.mxu0
    %v1801 = vadd.f32 %v1760, %v1800
    %v1802 = vpop.f32.mrf.mxu0
    %v1803 = vpop.f32.mrf.mxu0
    %1804 = vdwg.mxu0
    %1805 = vmatprep.subr.bf16.mxu0 %v1160
    %1806 = vmatpush1.bf16.msra.mxu0 %v1159
    %1807 = vmatprep.subr.bf16.mxu0 %v1156
    %1808 = vmatpush1.bf16.msra.mxu0 %v1155
    %1809 = vmatprep.subr.bf16.mxu0 %v1152
    %1810 = vmatpush1.bf16.msra.mxu0 %v1151
    %1811 = vmatprep.subr.bf16.mxu0 %v1148
    %1812 = vmatpush1.bf16.msra.mxu0 %v1147
    %1813 = vmatprep.subr.bf16.mxu0 %v1144
    %1814 = vmatpush1.bf16.msra.mxu0 %v1143
    %1815 = vmatprep.subr.bf16.mxu0 %v1140
    %1816 = vmatpush1.bf16.msra.mxu0 %v1139
    %1817 = vmatprep.subr.bf16.mxu0 %v1136
    %1818 = vmatpush1.bf16.msra.mxu0 %v1135
    %1819 = vmatprep.subr.bf16.mxu0 %v1132
    %1820 = vmatpush1.bf16.msra.mxu0 %v1131
    %1821 = vmatprep.subr.bf16.mxu0 %v1192
    %1822 = vmatpush2.bf16.msra.mxu0 %v1191
    %1823 = vmatprep.subr.bf16.mxu0 %v1188
    %1824 = vmatpush2.bf16.msra.mxu0 %v1187
    %1825 = vmatprep.subr.bf16.mxu0 %v1184
    %1826 = vmatpush2.bf16.msra.mxu0 %v1183
    %1827 = vmatprep.subr.bf16.mxu0 %v1180
    %1828 = vmatpush2.bf16.msra.mxu0 %v1179
    %1829 = vmatprep.subr.bf16.mxu0 %v1176
    %1830 = vmatpush2.bf16.msra.mxu0 %v1175
    %1831 = vmatprep.subr.bf16.mxu0 %v1172
    %1832 = vmatpush2.bf16.msra.mxu0 %v1171
    %1833 = vmatprep.subr.bf16.mxu0 %v1168
    %1834 = vmatpush2.bf16.msra.mxu0 %v1167
    %1835 = vmatprep.subr.bf16.mxu0 %v1164
    %1836 = vmatpush2.bf16.msra.mxu0 %v1163
    %1837 = vmatprep.mubr.bf16.mxu0 %v76
    %1838 = vmatmul.mubr.bf16.gmra.mxu0 %v75
    %v1839 = vpop.f32.mrf.mxu0
    %v1840 = vadd.f32 %v352, %v1839
    %v1841 = vpop.f32.mrf.mxu0
    %v1842 = vadd.f32 %v356, %v1841
    %v1843 = vpop.f32.mrf.mxu0
    %v1844 = vpop.f32.mrf.mxu0
    %1845 = vdwg.mxu0
    %1846 = vmatprep.subr.bf16.mxu0 %v1224
    %1847 = vmatpush1.bf16.msra.mxu0 %v1223
    %1848 = vmatprep.subr.bf16.mxu0 %v1220
    %1849 = vmatpush1.bf16.msra.mxu0 %v1219
    %1850 = vmatprep.subr.bf16.mxu0 %v1216
    %1851 = vmatpush1.bf16.msra.mxu0 %v1215
    %1852 = vmatprep.subr.bf16.mxu0 %v1212
    %1853 = vmatpush1.bf16.msra.mxu0 %v1211
    %1854 = vmatprep.subr.bf16.mxu0 %v1208
    %1855 = vmatpush1.bf16.msra.mxu0 %v1207
    %1856 = vmatprep.subr.bf16.mxu0 %v1204
    %1857 = vmatpush1.bf16.msra.mxu0 %v1203
    %1858 = vmatprep.subr.bf16.mxu0 %v1200
    %1859 = vmatpush1.bf16.msra.mxu0 %v1199
    %1860 = vmatprep.subr.bf16.mxu0 %v1196
    %1861 = vmatpush1.bf16.msra.mxu0 %v1195
    %1862 = vmatprep.subr.bf16.mxu0 %v1256
    %1863 = vmatpush2.bf16.msra.mxu0 %v1255
    %1864 = vmatprep.subr.bf16.mxu0 %v1252
    %1865 = vmatpush2.bf16.msra.mxu0 %v1251
    %1866 = vmatprep.subr.bf16.mxu0 %v1248
    %1867 = vmatpush2.bf16.msra.mxu0 %v1247
    %1868 = vmatprep.subr.bf16.mxu0 %v1244
    %1869 = vmatpush2.bf16.msra.mxu0 %v1243
    %1870 = vmatprep.subr.bf16.mxu0 %v1240
    %1871 = vmatpush2.bf16.msra.mxu0 %v1239
    %1872 = vmatprep.subr.bf16.mxu0 %v1236
    %1873 = vmatpush2.bf16.msra.mxu0 %v1235
    %1874 = vmatprep.subr.bf16.mxu0 %v1232
    %1875 = vmatpush2.bf16.msra.mxu0 %v1231
    %1876 = vmatprep.subr.bf16.mxu0 %v1228
    %1877 = vmatpush2.bf16.msra.mxu0 %v1227
    %1878 = vmatprep.mubr.bf16.mxu0 %v78
    %1879 = vmatmul.mubr.bf16.gmra.mxu0 %v77
    %v1880 = vpop.f32.mrf.mxu0
    %v1881 = vadd.f32 %v1840, %v1880
    %v1882 = vpop.f32.mrf.mxu0
    %v1883 = vadd.f32 %v1842, %v1882
    %v1884 = vpop.f32.mrf.mxu0
    %v1885 = vpop.f32.mrf.mxu0
    %1886 = vdwg.mxu0
    %1887 = vmatprep.subr.bf16.mxu0 %v1288
    %1888 = vmatpush1.bf16.msra.mxu0 %v1287
    %1889 = vmatprep.subr.bf16.mxu0 %v1284
    %1890 = vmatpush1.bf16.msra.mxu0 %v1283
    %1891 = vmatprep.subr.bf16.mxu0 %v1280
    %1892 = vmatpush1.bf16.msra.mxu0 %v1279
    %1893 = vmatprep.subr.bf16.mxu0 %v1276
    %1894 = vmatpush1.bf16.msra.mxu0 %v1275
    %1895 = vmatprep.subr.bf16.mxu0 %v1272
    %1896 = vmatpush1.bf16.msra.mxu0 %v1271
    %1897 = vmatprep.subr.bf16.mxu0 %v1268
    %1898 = vmatpush1.bf16.msra.mxu0 %v1267
    %1899 = vmatprep.subr.bf16.mxu0 %v1264
    %1900 = vmatpush1.bf16.msra.mxu0 %v1263
    %1901 = vmatprep.subr.bf16.mxu0 %v1260
    %1902 = vmatpush1.bf16.msra.mxu0 %v1259
    %1903 = vmatprep.subr.bf16.mxu0 %v1320
    %1904 = vmatpush2.bf16.msra.mxu0 %v1319
    %1905 = vmatprep.subr.bf16.mxu0 %v1316
    %1906 = vmatpush2.bf16.msra.mxu0 %v1315
    %1907 = vmatprep.subr.bf16.mxu0 %v1312
    %1908 = vmatpush2.bf16.msra.mxu0 %v1311
    %1909 = vmatprep.subr.bf16.mxu0 %v1308
    %1910 = vmatpush2.bf16.msra.mxu0 %v1307
    %1911 = vmatprep.subr.bf16.mxu0 %v1304
    %1912 = vmatpush2.bf16.msra.mxu0 %v1303
    %1913 = vmatprep.subr.bf16.mxu0 %v1300
    %1914 = vmatpush2.bf16.msra.mxu0 %v1299
    %1915 = vmatprep.subr.bf16.mxu0 %v1296
    %1916 = vmatpush2.bf16.msra.mxu0 %v1295
    %1917 = vmatprep.subr.bf16.mxu0 %v1292
    %1918 = vmatpush2.bf16.msra.mxu0 %v1291
    %1919 = vmatprep.mubr.bf16.mxu0 %v80
    %1920 = vmatmul.mubr.bf16.gmra.mxu0 %v79
    %v1921 = vpop.f32.mrf.mxu0
    %v1922 = vadd.f32 %v1881, %v1921
    %v1923 = vpop.f32.mrf.mxu0
    %v1924 = vadd.f32 %v1883, %v1923
    %v1925 = vpop.f32.mrf.mxu0
    %v1926 = vpop.f32.mrf.mxu0
    %1927 = vdwg.mxu0
    %1928 = vmatprep.subr.bf16.mxu0 %v1352
    %1929 = vmatpush1.bf16.msra.mxu0 %v1351
    %1930 = vmatprep.subr.bf16.mxu0 %v1348
    %1931 = vmatpush1.bf16.msra.mxu0 %v1347
    %1932 = vmatprep.subr.bf16.mxu0 %v1344
    %1933 = vmatpush1.bf16.msra.mxu0 %v1343
    %1934 = vmatprep.subr.bf16.mxu0 %v1340
    %1935 = vmatpush1.bf16.msra.mxu0 %v1339
    %1936 = vmatprep.subr.bf16.mxu0 %v1336
    %1937 = vmatpush1.bf16.msra.mxu0 %v1335
    %1938 = vmatprep.subr.bf16.mxu0 %v1332
    %1939 = vmatpush1.bf16.msra.mxu0 %v1331
    %1940 = vmatprep.subr.bf16.mxu0 %v1328
    %1941 = vmatpush1.bf16.msra.mxu0 %v1327
    %1942 = vmatprep.subr.bf16.mxu0 %v1324
    %1943 = vmatpush1.bf16.msra.mxu0 %v1323
    %1944 = vmatprep.subr.bf16.mxu0 %v1384
    %1945 = vmatpush2.bf16.msra.mxu0 %v1383
    %1946 = vmatprep.subr.bf16.mxu0 %v1380
    %1947 = vmatpush2.bf16.msra.mxu0 %v1379
    %1948 = vmatprep.subr.bf16.mxu0 %v1376
    %1949 = vmatpush2.bf16.msra.mxu0 %v1375
    %1950 = vmatprep.subr.bf16.mxu0 %v1372
    %1951 = vmatpush2.bf16.msra.mxu0 %v1371
    %1952 = vmatprep.subr.bf16.mxu0 %v1368
    %1953 = vmatpush2.bf16.msra.mxu0 %v1367
    %1954 = vmatprep.subr.bf16.mxu0 %v1364
    %1955 = vmatpush2.bf16.msra.mxu0 %v1363
    %1956 = vmatprep.subr.bf16.mxu0 %v1360
    %1957 = vmatpush2.bf16.msra.mxu0 %v1359
    %1958 = vmatprep.subr.bf16.mxu0 %v1356
    %1959 = vmatpush2.bf16.msra.mxu0 %v1355
    %1960 = vmatprep.mubr.bf16.mxu0 %v82
    %1961 = vmatmul.mubr.bf16.gmra.mxu0 %v81
    %v1962 = vpop.f32.mrf.mxu0
    %v1963 = vadd.f32 %v1922, %v1962
    %v1964 = vpop.f32.mrf.mxu0
    %v1965 = vadd.f32 %v1924, %v1964
    %v1966 = vpop.f32.mrf.mxu0
    %v1967 = vpop.f32.mrf.mxu0
    %1968 = vdwg.mxu0
    %vm1969 = vcmp.gt.f32.partialorder %v1799, 0.0
    %vm1970 = vcmp.gt.f32.partialorder %v1801, 0.0
    %vm1971 = vcmp.gt.f32.partialorder %v1963, 0.0
    %vm1972 = vcmp.gt.f32.partialorder %v1965, 0.0
    %v1973 = vmul.f32 %v1799, 0.2
    %v1974 = vmul.f32 %v1801, 0.2
    %v1975 = vmul.f32 %v1963, 0.2
    %v1976 = vmul.f32 %v1965, 0.2
    %v1977 = vsel %vm1969, %v1799, %v1973
    %v1978 = vsel %vm1970, %v1801, %v1974
    %v1979 = vsel %vm1971, %v1963, %v1975
    %v1980 = vsel %vm1972, %v1965, %v1976
    %v1981 = vpack.c.bf16 %v1977, %v1977
    %v1982 = vpack.c.bf16 %v1978, %v1978
    %v1983 = vpack.c.bf16 %v1979, %v1979
    %v1984 = vpack.c.bf16 %v1980, %v1980
    %v1985 = vld [vmem:[#allocation7] sm:$0xff]
    %v1986 = vld [vmem:[#allocation7 + $0x8] sm:$0xff]
    %v1987 = vld [vmem:[#allocation7 + $0x10] sm:$0xff]
    %v1988 = vld [vmem:[#allocation7 + $0x18] sm:$0xff]
    %v1989 = vld [vmem:[#allocation7 + $0x20] sm:$0xff]
    %v1990 = vld [vmem:[#allocation7 + $0x28] sm:$0xff]
    %v1991 = vld [vmem:[#allocation7 + $0x30] sm:$0xff]
    %v1992 = vld [vmem:[#allocation7 + $0x38] sm:$0xff]
    %v1993 = vld [vmem:[#allocation7 + $0x40] sm:$0xff]
    %v1994 = vld [vmem:[#allocation7 + $0x48] sm:$0xff]
    %v1995 = vld [vmem:[#allocation7 + $0x50] sm:$0xff]
    %v1996 = vld [vmem:[#allocation7 + $0x58] sm:$0xff]
    %v1997 = vld [vmem:[#allocation7 + $0x60] sm:$0xff]
    %v1998 = vld [vmem:[#allocation7 + $0x68] sm:$0xff]
    %v1999 = vld [vmem:[#allocation7 + $0x70] sm:$0xff]
    %v2000 = vld [vmem:[#allocation7 + $0x78] sm:$0xff]
    %v2001 = vld [vmem:[#allocation7 + $0x80] sm:$0xff]
    %v2002 = vld [vmem:[#allocation7 + $0x88] sm:$0xff]
    %v2003 = vld [vmem:[#allocation7 + $0x90] sm:$0xff]
    %v2004 = vld [vmem:[#allocation7 + $0x98] sm:$0xff]
    %v2005 = vld [vmem:[#allocation7 + $0xa0] sm:$0xff]
    %v2006 = vld [vmem:[#allocation7 + $0xa8] sm:$0xff]
    %v2007 = vld [vmem:[#allocation7 + $0xb0] sm:$0xff]
    %v2008 = vld [vmem:[#allocation7 + $0xb8] sm:$0xff]
    %v2009 = vld [vmem:[#allocation7 + $0xc0] sm:$0xff]
    %v2010 = vld [vmem:[#allocation7 + $0xc8] sm:$0xff]
    %v2011 = vld [vmem:[#allocation7 + $0xd0] sm:$0xff]
    %v2012 = vld [vmem:[#allocation7 + $0xd8] sm:$0xff]
    %v2013 = vld [vmem:[#allocation7 + $0xe0] sm:$0xff]
    %v2014 = vld [vmem:[#allocation7 + $0xe8] sm:$0xff]
    %v2015 = vld [vmem:[#allocation7 + $0xf0] sm:$0xff]
    %v2016 = vld [vmem:[#allocation7 + $0xf8] sm:$0xff]
    %v2017 = vld [vmem:[#allocation7 + $0x100] sm:$0xff]
    %v2018 = vld [vmem:[#allocation7 + $0x108] sm:$0xff]
    %v2019 = vld [vmem:[#allocation7 + $0x110] sm:$0xff]
    %v2020 = vld [vmem:[#allocation7 + $0x118] sm:$0xff]
    %v2021 = vld [vmem:[#allocation7 + $0x120] sm:$0xff]
    %v2022 = vld [vmem:[#allocation7 + $0x128] sm:$0xff]
    %v2023 = vld [vmem:[#allocation7 + $0x130] sm:$0xff]
    %v2024 = vld [vmem:[#allocation7 + $0x138] sm:$0xff]
    %v2025 = vld [vmem:[#allocation7 + $0x140] sm:$0xff]
    %v2026 = vld [vmem:[#allocation7 + $0x148] sm:$0xff]
    %v2027 = vld [vmem:[#allocation7 + $0x150] sm:$0xff]
    %v2028 = vld [vmem:[#allocation7 + $0x158] sm:$0xff]
    %v2029 = vld [vmem:[#allocation7 + $0x160] sm:$0xff]
    %v2030 = vld [vmem:[#allocation7 + $0x168] sm:$0xff]
    %v2031 = vld [vmem:[#allocation7 + $0x170] sm:$0xff]
    %v2032 = vld [vmem:[#allocation7 + $0x178] sm:$0xff]
    %v2033 = vld [vmem:[#allocation7 + $0x180] sm:$0xff]
    %v2034 = vld [vmem:[#allocation7 + $0x188] sm:$0xff]
    %v2035 = vld [vmem:[#allocation7 + $0x190] sm:$0xff]
    %v2036 = vld [vmem:[#allocation7 + $0x198] sm:$0xff]
    %v2037 = vld [vmem:[#allocation7 + $0x1a0] sm:$0xff]
    %v2038 = vld [vmem:[#allocation7 + $0x1a8] sm:$0xff]
    %v2039 = vld [vmem:[#allocation7 + $0x1b0] sm:$0xff]
    %v2040 = vld [vmem:[#allocation7 + $0x1b8] sm:$0xff]
    %v2041 = vld [vmem:[#allocation7 + $0x1c0] sm:$0xff]
    %v2042 = vld [vmem:[#allocation7 + $0x1c8] sm:$0xff]
    %v2043 = vld [vmem:[#allocation7 + $0x1d0] sm:$0xff]
    %v2044 = vld [vmem:[#allocation7 + $0x1d8] sm:$0xff]
    %v2045 = vld [vmem:[#allocation7 + $0x1e0] sm:$0xff]
    %v2046 = vld [vmem:[#allocation7 + $0x1e8] sm:$0xff]
    %v2047 = vld [vmem:[#allocation7 + $0x1f0] sm:$0xff]
    %v2048 = vld [vmem:[#allocation7 + $0x1f8] sm:$0xff]
    %v2049 = vld [vmem:[%s4] sm:$0x3]
    %v2051 = vlaneseq
    %v2052 = vshrl.u32 %v2051, 7
    %v2053 = vsub.s32 0, %v2052
    %v2054 = vrot.slane %v2049, %v2053
    %v2055 = vlaneseq
    %v2056 = vshrl.u32 %v2055, 7
    %v2057 = vsub.s32 1, %v2056
    %v2058 = vrot.slane %v2049, %v2057
    %v2125 = vunpack.c.l.b16 %v1985
    %v2126 = vunpack.c.h.b16 %v1985
    %v2127 = vunpack.c.l.b16 %v1986
    %v2128 = vunpack.c.h.b16 %v1986
    %v2129 = vunpack.c.l.b16 %v1987
    %v2130 = vunpack.c.h.b16 %v1987
    %v2131 = vunpack.c.l.b16 %v1988
    %v2132 = vunpack.c.h.b16 %v1988
    %v2133 = vunpack.c.l.b16 %v1989
    %v2134 = vunpack.c.h.b16 %v1989
    %v2135 = vunpack.c.l.b16 %v1990
    %v2136 = vunpack.c.h.b16 %v1990
    %v2137 = vunpack.c.l.b16 %v1991
    %v2138 = vunpack.c.h.b16 %v1991
    %v2139 = vunpack.c.l.b16 %v1992
    %v2140 = vunpack.c.h.b16 %v1992
    %v2141 = vunpack.c.l.b16 %v1993
    %v2142 = vunpack.c.h.b16 %v1993
    %v2143 = vunpack.c.l.b16 %v1994
    %v2144 = vunpack.c.h.b16 %v1994
    %v2145 = vunpack.c.l.b16 %v1995
    %v2146 = vunpack.c.h.b16 %v1995
    %v2147 = vunpack.c.l.b16 %v1996
    %v2148 = vunpack.c.h.b16 %v1996
    %v2149 = vunpack.c.l.b16 %v1997
    %v2150 = vunpack.c.h.b16 %v1997
    %v2151 = vunpack.c.l.b16 %v1998
    %v2152 = vunpack.c.h.b16 %v1998
    %v2153 = vunpack.c.l.b16 %v1999
    %v2154 = vunpack.c.h.b16 %v1999
    %v2155 = vunpack.c.l.b16 %v2000
    %v2156 = vunpack.c.h.b16 %v2000
    %v2157 = vunpack.c.l.b16 %v2001
    %v2158 = vunpack.c.h.b16 %v2001
    %v2159 = vunpack.c.l.b16 %v2002
    %v2160 = vunpack.c.h.b16 %v2002
    %v2161 = vunpack.c.l.b16 %v2003
    %v2162 = vunpack.c.h.b16 %v2003
    %v2163 = vunpack.c.l.b16 %v2004
    %v2164 = vunpack.c.h.b16 %v2004
    %v2165 = vunpack.c.l.b16 %v2005
    %v2166 = vunpack.c.h.b16 %v2005
    %v2167 = vunpack.c.l.b16 %v2006
    %v2168 = vunpack.c.h.b16 %v2006
    %v2169 = vunpack.c.l.b16 %v2007
    %v2170 = vunpack.c.h.b16 %v2007
    %v2171 = vunpack.c.l.b16 %v2008
    %v2172 = vunpack.c.h.b16 %v2008
    %v2173 = vunpack.c.l.b16 %v2009
    %v2174 = vunpack.c.h.b16 %v2009
    %v2175 = vunpack.c.l.b16 %v2010
    %v2176 = vunpack.c.h.b16 %v2010
    %v2177 = vunpack.c.l.b16 %v2011
    %v2178 = vunpack.c.h.b16 %v2011
    %v2179 = vunpack.c.l.b16 %v2012
    %v2180 = vunpack.c.h.b16 %v2012
    %v2181 = vunpack.c.l.b16 %v2013
    %v2182 = vunpack.c.h.b16 %v2013
    %v2183 = vunpack.c.l.b16 %v2014
    %v2184 = vunpack.c.h.b16 %v2014
    %v2185 = vunpack.c.l.b16 %v2015
    %v2186 = vunpack.c.h.b16 %v2015
    %v2187 = vunpack.c.l.b16 %v2016
    %v2188 = vunpack.c.h.b16 %v2016
    %v2189 = vunpack.c.l.b16 %v2017
    %v2190 = vunpack.c.h.b16 %v2017
    %v2191 = vunpack.c.l.b16 %v2018
    %v2192 = vunpack.c.h.b16 %v2018
    %v2193 = vunpack.c.l.b16 %v2019
    %v2194 = vunpack.c.h.b16 %v2019
    %v2195 = vunpack.c.l.b16 %v2020
    %v2196 = vunpack.c.h.b16 %v2020
    %v2197 = vunpack.c.l.b16 %v2021
    %v2198 = vunpack.c.h.b16 %v2021
    %v2199 = vunpack.c.l.b16 %v2022
    %v2200 = vunpack.c.h.b16 %v2022
    %v2201 = vunpack.c.l.b16 %v2023
    %v2202 = vunpack.c.h.b16 %v2023
    %v2203 = vunpack.c.l.b16 %v2024
    %v2204 = vunpack.c.h.b16 %v2024
    %v2205 = vunpack.c.l.b16 %v2025
    %v2206 = vunpack.c.h.b16 %v2025
    %v2207 = vunpack.c.l.b16 %v2026
    %v2208 = vunpack.c.h.b16 %v2026
    %v2209 = vunpack.c.l.b16 %v2027
    %v2210 = vunpack.c.h.b16 %v2027
    %v2211 = vunpack.c.l.b16 %v2028
    %v2212 = vunpack.c.h.b16 %v2028
    %v2213 = vunpack.c.l.b16 %v2029
    %v2214 = vunpack.c.h.b16 %v2029
    %v2215 = vunpack.c.l.b16 %v2030
    %v2216 = vunpack.c.h.b16 %v2030
    %v2217 = vunpack.c.l.b16 %v2031
    %v2218 = vunpack.c.h.b16 %v2031
    %v2219 = vunpack.c.l.b16 %v2032
    %v2220 = vunpack.c.h.b16 %v2032
    %v2221 = vunpack.c.l.b16 %v2033
    %v2222 = vunpack.c.h.b16 %v2033
    %v2223 = vunpack.c.l.b16 %v2034
    %v2224 = vunpack.c.h.b16 %v2034
    %v2225 = vunpack.c.l.b16 %v2035
    %v2226 = vunpack.c.h.b16 %v2035
    %v2227 = vunpack.c.l.b16 %v2036
    %v2228 = vunpack.c.h.b16 %v2036
    %v2229 = vunpack.c.l.b16 %v2037
    %v2230 = vunpack.c.h.b16 %v2037
    %v2231 = vunpack.c.l.b16 %v2038
    %v2232 = vunpack.c.h.b16 %v2038
    %v2233 = vunpack.c.l.b16 %v2039
    %v2234 = vunpack.c.h.b16 %v2039
    %v2235 = vunpack.c.l.b16 %v2040
    %v2236 = vunpack.c.h.b16 %v2040
    %v2237 = vunpack.c.l.b16 %v2041
    %v2238 = vunpack.c.h.b16 %v2041
    %v2239 = vunpack.c.l.b16 %v2042
    %v2240 = vunpack.c.h.b16 %v2042
    %v2241 = vunpack.c.l.b16 %v2043
    %v2242 = vunpack.c.h.b16 %v2043
    %v2243 = vunpack.c.l.b16 %v2044
    %v2244 = vunpack.c.h.b16 %v2044
    %v2245 = vunpack.c.l.b16 %v2045
    %v2246 = vunpack.c.h.b16 %v2045
    %v2247 = vunpack.c.l.b16 %v2046
    %v2248 = vunpack.c.h.b16 %v2046
    %v2249 = vunpack.c.l.b16 %v2047
    %v2250 = vunpack.c.h.b16 %v2047
    %v2251 = vunpack.c.l.b16 %v2048
    %v2252 = vunpack.c.h.b16 %v2048
    %v2253 = vpack.c.b16 %v2127, %v2125
    %v2254 = vpack.c.b16 %v2128, %v2126
    %v2255 = vpack.c.b16 %v2131, %v2129
    %v2256 = vpack.c.b16 %v2132, %v2130
    %v2257 = vpack.c.b16 %v2135, %v2133
    %v2258 = vpack.c.b16 %v2136, %v2134
    %v2259 = vpack.c.b16 %v2139, %v2137
    %v2260 = vpack.c.b16 %v2140, %v2138
    %v2261 = vpack.c.b16 %v2143, %v2141
    %v2262 = vpack.c.b16 %v2144, %v2142
    %v2263 = vpack.c.b16 %v2147, %v2145
    %v2264 = vpack.c.b16 %v2148, %v2146
    %v2265 = vpack.c.b16 %v2151, %v2149
    %v2266 = vpack.c.b16 %v2152, %v2150
    %v2267 = vpack.c.b16 %v2155, %v2153
    %v2268 = vpack.c.b16 %v2156, %v2154
    %v2269 = vpack.c.b16 %v2159, %v2157
    %v2270 = vpack.c.b16 %v2160, %v2158
    %v2271 = vpack.c.b16 %v2163, %v2161
    %v2272 = vpack.c.b16 %v2164, %v2162
    %v2273 = vpack.c.b16 %v2167, %v2165
    %v2274 = vpack.c.b16 %v2168, %v2166
    %v2275 = vpack.c.b16 %v2171, %v2169
    %v2276 = vpack.c.b16 %v2172, %v2170
    %v2277 = vpack.c.b16 %v2175, %v2173
    %v2278 = vpack.c.b16 %v2176, %v2174
    %v2279 = vpack.c.b16 %v2179, %v2177
    %v2280 = vpack.c.b16 %v2180, %v2178
    %v2281 = vpack.c.b16 %v2183, %v2181
    %v2282 = vpack.c.b16 %v2184, %v2182
    %v2283 = vpack.c.b16 %v2187, %v2185
    %v2284 = vpack.c.b16 %v2188, %v2186
    %v2285 = vpack.c.b16 %v2191, %v2189
    %v2286 = vpack.c.b16 %v2192, %v2190
    %v2287 = vpack.c.b16 %v2195, %v2193
    %v2288 = vpack.c.b16 %v2196, %v2194
    %v2289 = vpack.c.b16 %v2199, %v2197
    %v2290 = vpack.c.b16 %v2200, %v2198
    %v2291 = vpack.c.b16 %v2203, %v2201
    %v2292 = vpack.c.b16 %v2204, %v2202
    %v2293 = vpack.c.b16 %v2207, %v2205
    %v2294 = vpack.c.b16 %v2208, %v2206
    %v2295 = vpack.c.b16 %v2211, %v2209
    %v2296 = vpack.c.b16 %v2212, %v2210
    %v2297 = vpack.c.b16 %v2215, %v2213
    %v2298 = vpack.c.b16 %v2216, %v2214
    %v2299 = vpack.c.b16 %v2219, %v2217
    %v2300 = vpack.c.b16 %v2220, %v2218
    %v2301 = vpack.c.b16 %v2223, %v2221
    %v2302 = vpack.c.b16 %v2224, %v2222
    %v2303 = vpack.c.b16 %v2227, %v2225
    %v2304 = vpack.c.b16 %v2228, %v2226
    %v2305 = vpack.c.b16 %v2231, %v2229
    %v2306 = vpack.c.b16 %v2232, %v2230
    %v2307 = vpack.c.b16 %v2235, %v2233
    %v2308 = vpack.c.b16 %v2236, %v2234
    %v2309 = vpack.c.b16 %v2239, %v2237
    %v2310 = vpack.c.b16 %v2240, %v2238
    %v2311 = vpack.c.b16 %v2243, %v2241
    %v2312 = vpack.c.b16 %v2244, %v2242
    %v2313 = vpack.c.b16 %v2247, %v2245
    %v2314 = vpack.c.b16 %v2248, %v2246
    %v2315 = vpack.c.b16 %v2251, %v2249
    %v2316 = vpack.c.b16 %v2252, %v2250
    %2381 = vmatprep.subr.bf16.mxu0 %v2268
    %2382 = vmatpush1.bf16.msra.mxu0 %v2267
    %2383 = vmatprep.subr.bf16.mxu0 %v2266
    %2384 = vmatpush1.bf16.msra.mxu0 %v2265
    %2385 = vmatprep.subr.bf16.mxu0 %v2264
    %2386 = vmatpush1.bf16.msra.mxu0 %v2263
    %2387 = vmatprep.subr.bf16.mxu0 %v2262
    %2388 = vmatpush1.bf16.msra.mxu0 %v2261
    %2389 = vmatprep.subr.bf16.mxu0 %v2260
    %2390 = vmatpush1.bf16.msra.mxu0 %v2259
    %2391 = vmatprep.subr.bf16.mxu0 %v2258
    %2392 = vmatpush1.bf16.msra.mxu0 %v2257
    %2393 = vmatprep.subr.bf16.mxu0 %v2256
    %2394 = vmatpush1.bf16.msra.mxu0 %v2255
    %2395 = vmatprep.subr.bf16.mxu0 %v2254
    %2396 = vmatpush1.bf16.msra.mxu0 %v2253
    %2397 = vmatprep.subr.bf16.mxu0 %v2284
    %2398 = vmatpush2.bf16.msra.mxu0 %v2283
    %2399 = vmatprep.subr.bf16.mxu0 %v2282
    %2400 = vmatpush2.bf16.msra.mxu0 %v2281
    %2401 = vmatprep.subr.bf16.mxu0 %v2280
    %2402 = vmatpush2.bf16.msra.mxu0 %v2279
    %2403 = vmatprep.subr.bf16.mxu0 %v2278
    %2404 = vmatpush2.bf16.msra.mxu0 %v2277
    %2405 = vmatprep.subr.bf16.mxu0 %v2276
    %2406 = vmatpush2.bf16.msra.mxu0 %v2275
    %2407 = vmatprep.subr.bf16.mxu0 %v2274
    %2408 = vmatpush2.bf16.msra.mxu0 %v2273
    %2409 = vmatprep.subr.bf16.mxu0 %v2272
    %2410 = vmatpush2.bf16.msra.mxu0 %v2271
    %2411 = vmatprep.subr.bf16.mxu0 %v2270
    %2412 = vmatpush2.bf16.msra.mxu0 %v2269
    %2413 = vmatprep.mubr.bf16.mxu0 %v1982
    %2414 = vmatmul.mubr.bf16.gmra.mxu0 %v1981
    %v2415 = vpop.f32.mrf.mxu0
    %v2416 = vadd.f32 %v2054, %v2415
    %v2417 = vpop.f32.mrf.mxu0
    %v2418 = vadd.f32 %v2058, %v2417
    %v2419 = vpop.f32.mrf.mxu0
    %v2420 = vpop.f32.mrf.mxu0
    %2421 = vdwg.mxu0
    %2422 = vmatprep.subr.bf16.mxu0 %v2300
    %2423 = vmatpush1.bf16.msra.mxu0 %v2299
    %2424 = vmatprep.subr.bf16.mxu0 %v2298
    %2425 = vmatpush1.bf16.msra.mxu0 %v2297
    %2426 = vmatprep.subr.bf16.mxu0 %v2296
    %2427 = vmatpush1.bf16.msra.mxu0 %v2295
    %2428 = vmatprep.subr.bf16.mxu0 %v2294
    %2429 = vmatpush1.bf16.msra.mxu0 %v2293
    %2430 = vmatprep.subr.bf16.mxu0 %v2292
    %2431 = vmatpush1.bf16.msra.mxu0 %v2291
    %2432 = vmatprep.subr.bf16.mxu0 %v2290
    %2433 = vmatpush1.bf16.msra.mxu0 %v2289
    %2434 = vmatprep.subr.bf16.mxu0 %v2288
    %2435 = vmatpush1.bf16.msra.mxu0 %v2287
    %2436 = vmatprep.subr.bf16.mxu0 %v2286
    %2437 = vmatpush1.bf16.msra.mxu0 %v2285
    %2438 = vmatprep.subr.bf16.mxu0 %v2316
    %2439 = vmatpush2.bf16.msra.mxu0 %v2315
    %2440 = vmatprep.subr.bf16.mxu0 %v2314
    %2441 = vmatpush2.bf16.msra.mxu0 %v2313
    %2442 = vmatprep.subr.bf16.mxu0 %v2312
    %2443 = vmatpush2.bf16.msra.mxu0 %v2311
    %2444 = vmatprep.subr.bf16.mxu0 %v2310
    %2445 = vmatpush2.bf16.msra.mxu0 %v2309
    %2446 = vmatprep.subr.bf16.mxu0 %v2308
    %2447 = vmatpush2.bf16.msra.mxu0 %v2307
    %2448 = vmatprep.subr.bf16.mxu0 %v2306
    %2449 = vmatpush2.bf16.msra.mxu0 %v2305
    %2450 = vmatprep.subr.bf16.mxu0 %v2304
    %2451 = vmatpush2.bf16.msra.mxu0 %v2303
    %2452 = vmatprep.subr.bf16.mxu0 %v2302
    %2453 = vmatpush2.bf16.msra.mxu0 %v2301
    %2454 = vmatprep.mubr.bf16.mxu0 %v1984
    %2455 = vmatmul.mubr.bf16.gmra.mxu0 %v1983
    %v2456 = vpop.f32.mrf.mxu0
    %v2457 = vadd.f32 %v2416, %v2456
    %v2458 = vpop.f32.mrf.mxu0
    %v2459 = vadd.f32 %v2418, %v2458
    %v2460 = vpop.f32.mrf.mxu0
    %v2461 = vpop.f32.mrf.mxu0
    %2462 = vdwg.mxu0
    %vm2463 = vcmp.gt.f32.partialorder %v2457, 0.0
    %vm2464 = vcmp.gt.f32.partialorder %v2459, 0.0
    %v2465 = vmul.f32 %v2457, 0.2
    %v2466 = vmul.f32 %v2459, 0.2
    %v2467 = vsel %vm2463, %v2457, %v2465
    %v2468 = vsel %vm2464, %v2459, %v2466
    %v2469 = vld [vmem:[%s5] sm:$0x3]
    %v2471 = vlaneseq
    %v2472 = vshrl.u32 %v2471, 7
    %v2473 = vsub.s32 0, %v2472
    %v2474 = vrot.slane %v2469, %v2473
    %v2475 = vlaneseq
    %v2476 = vshrl.u32 %v2475, 7
    %v2477 = vsub.s32 1, %v2476
    %v2478 = vrot.slane %v2469, %v2477
    %v2481 = vmul.f32 %v2467, %v2474
    %v2482 = vmul.f32 %v2468, %v2478
    %v2483 = vadd.f32 %v2481, %v2482
    %2484 = vadd.xlane.f32.xlu0 %v2483
    %v2485 = vpop.xlane.xlu0 %2484
    %v2486 = vld [vmem:[#allocation2] sm:$0x1]
    %v2488 = vlaneseq
    %v2489 = vshrl.u32 %v2488, 7
    %v2490 = vsub.s32 0, %v2489
    %v2491 = vrot.slane %v2486, %v2490
    %v2493 = vadd.f32 %v2485, %v2491
    %v2494 = vand.u32 2147483647, %v2493
    %v2495 = vsub.f32 0.0, %v2494
    %v2496 = vmul.f32 %v2495, 1.442695
    %v2497 = vpow.pop %v2496
    %v2498 = vadd.f32 %v2497, 1.0
    %v2499 = vrcp.pop %v2498
    %vm2500 = vcmp.ge.f32.partialorder %v2493, 0.0
    %v2501 = vmul.f32 %v2497, %v2499
    %v2502 = vsel %vm2500, %v2499, %v2501
    %vm2503 = vcmask 7168
    %2504 = vst.msk [vmem:[%s7] sm:$0xff] %vm2503, %v2502
    // Predicated region
    $region42: #{tpu_custom_call.1} parent=1 // pred_check
      _
    $region43: #{tpu_custom_call.1} parent=1 // pred_check_branch
      %2506 = sbr.rel (0) target = $region45
    $region44: #{tpu_custom_call.1} parent=1 // pred_region
      _
    $region45: #{tpu_custom_call.1} parent=1 // pred_fallthru
      _
    // Predicated region
    $region46: #{tpu_custom_call.1} parent=1 // pred_check
      _
    $region47: #{tpu_custom_call.1} parent=1 // pred_check_branch
      %2508 = sbr.rel (0) target = $region49
    $region48: #{tpu_custom_call.1} parent=1 // pred_region
      _
    $region49: #{tpu_custom_call.1} parent=1 // pred_fallthru
      _
    %2509 = vsyncpa [#allocation4], 1
    %2510 = vsyncpa [#allocation6], 1

</llo_original>
